<compile_context>
chip_gen: v7x
topology: tpu7x:2x2x1
jax: 0.10.0
libtpu: 0.0.40
codegen_flags: <defaults>
</compile_context>

<pallas_src>
import functools

import jax
import jax.numpy as jnp
from jax.experimental import pallas as pl
from jax.experimental.pallas import tpu as pltpu

INPUT_SIZE = 3
HIDDEN = 32          # small-shape stand-in for the module's hidden_size=128
NUM_CLASSES = 29
I_PAD = 8            # tiny input-feature pad 3 -> 8 (no 128-wide inflation of x)
C_PAD = 128          # lane-dense classifier width (wrapper slices back to 29)

# Recurrent-matmul operand dtype.  Set to jnp.bfloat16 for single-pass MXU dots
# on the critical h-chain; the final tolerance check must then be loosened to
# ~2e-2 (rounding amplified over 8 steps).  Kept f32 for 1e-4 reference parity.
MXU_DTYPE = jnp.float32


def _slab_rows(H):
    """Static row offsets of each tensor inside the packed parameter slab."""
    r_wih0 = 0
    r_whh0 = r_wih0 + I_PAD
    r_wih1 = r_whh0 + H
    r_whh1 = r_wih1 + H
    r_wc = r_whh1 + H
    r_b0 = r_wc + H
    r_b1 = r_b0 + 1
    r_bc = r_b1 + 1
    n_rows = ((r_bc + 1 + 7) // 8) * 8   # pad row count to a sublane multiple
    return dict(wih0=r_wih0, whh0=r_whh0, wih1=r_wih1, whh1=r_whh1,
                wc=r_wc, b0=r_b0, b1=r_b1, bc=r_bc, rows=n_rows)


def asl_lstm_kernel(x_ref, p_ref, out_ref, *, T, B, H):
    G = 4 * H
    r = _slab_rows(H)

    # ---- static slab slices (loop-invariant; ref slicing is free) ----------
    wih0 = p_ref[r["wih0"]:r["wih0"] + I_PAD, :]                       # (8, 4H)
    whh0 = p_ref[r["whh0"]:r["whh0"] + H, :].astype(MXU_DTYPE)         # (H, 4H)
    wih1 = p_ref[r["wih1"]:r["wih1"] + H, :].astype(MXU_DTYPE)         # (H, 4H)
    whh1 = p_ref[r["whh1"]:r["whh1"] + H, :].astype(MXU_DTYPE)         # (H, 4H)
    wc = p_ref[r["wc"]:r["wc"] + H, :]                                 # (H, 128)
    b0 = p_ref[r["b0"]:r["b0"] + 1, :]                                 # (1, 4H)
    b1 = jnp.broadcast_to(p_ref[r["b1"]:r["b1"] + 1, :], (B, G))
    bc = jnp.broadcast_to(p_ref[r["bc"]:r["bc"] + 1, :], (B, C_PAD))

    # ---- layer-0 input projections: ONE batched matmul, off the h-chain ----
    xg_all = (jnp.dot(x_ref[...], wih0, preferred_element_type=jnp.float32)
              + jnp.broadcast_to(b0, (T * B, G)))                      # (T*B, 4H)

    # Hoisted lane mask selecting the g-gate region [2H, 3H) of the 4H lanes.
    lane = jax.lax.broadcasted_iota(jnp.int32, (B, G), 1)
    g_region = (lane >= 2 * H) & (lane < 3 * H)

    def lstm_cell(gates, c_prev):
        # 2 whole-vreg EUP pushes + 1 VPU select (was 3 sigmoid + 1 tanh on
        # 32-lane slices).  PyTorch gate order along 4H: i, f, g, o.
        act = jnp.where(g_region, jnp.tanh(gates), jax.nn.sigmoid(gates))
        i_g = act[:, 0 * H:1 * H]
        f_g = act[:, 1 * H:2 * H]
        g_g = act[:, 2 * H:3 * H]
        o_g = act[:, 3 * H:4 * H]
        c_new = f_g * c_prev + i_g * g_g
        h_new = o_g * jnp.tanh(c_new)
        return h_new, c_new

    h0 = jnp.zeros((B, H), jnp.float32)
    c0 = jnp.zeros((B, H), jnp.float32)
    h1 = jnp.zeros((B, H), jnp.float32)
    c1 = jnp.zeros((B, H), jnp.float32)

    # Static trip count -> fully unrolled; states are loop-carried values.
    for t in range(T):
        xg_t = xg_all[t * B:(t + 1) * B, :]          # already contains b0
        if t == 0:
            g0 = xg_t                                # h0 == 0: skip zero dot
        else:
            g0 = xg_t + jnp.dot(h0.astype(MXU_DTYPE), whh0,
                                preferred_element_type=jnp.float32)
        h0, c0 = lstm_cell(g0, c0)

        # Off-chain partial first (depends only on the previous step's h1);
        # keeps the b1 add off the serial critical path.
        if t == 0:
            g1_off = b1                              # h1 == 0: skip zero dot
        else:
            g1_off = jnp.dot(h1.astype(MXU_DTYPE), whh1,
                             preferred_element_type=jnp.float32) + b1
        g1 = jnp.dot(h0.astype(MXU_DTYPE), wih1,
                     preferred_element_type=jnp.float32) + g1_off
        h1, c1 = lstm_cell(g1, c1)

    # Lane-dense classifier (C_PAD = 128 wide): unmasked full-lane store.
    out_ref[...] = jnp.dot(h1, wc, preferred_element_type=jnp.float32) + bc


def asl_lstm_forward(x, params):
    """x: (B, T, INPUT_SIZE) float32 (batch_first, like PyTorch)."""
    B, T, I = x.shape
    H = params["whh0"].shape[0]
    C = params["wc"].shape[1]
    G = 4 * H
    assert G == C_PAD, "slab packing assumes 4*H == C_PAD"
    r = _slab_rows(H)

    # Time-major, flattened to (T*B, I_PAD): feeds one batched matmul in-kernel.
    x_tm = jnp.transpose(x, (1, 0, 2)).reshape(T * B, I)
    x2d = jnp.zeros((T * B, I_PAD), jnp.float32).at[:, :I].set(x_tm)

    # Pack every weight/bias into ONE (rows, 128) f32 slab -> a single DMA.
    # Zero-padded rows/cols are inert in the matmuls.
    slab = jnp.zeros((r["rows"], G), jnp.float32)
    slab = slab.at[r["wih0"]:r["wih0"] + I, :].set(params["wih0"])
    slab = slab.at[r["whh0"]:r["whh0"] + H, :].set(params["whh0"])
    slab = slab.at[r["wih1"]:r["wih1"] + H, :].set(params["wih1"])
    slab = slab.at[r["whh1"]:r["whh1"] + H, :].set(params["whh1"])
    slab = slab.at[r["wc"]:r["wc"] + H, :C].set(params["wc"])
    slab = slab.at[r["b0"], :].set(params["b0"][0])
    slab = slab.at[r["b1"], :].set(params["b1"][0])
    slab = slab.at[r["bc"], :C].set(params["bc"][0])

    vmem = lambda: pl.BlockSpec(memory_space=pltpu.MemorySpace.VMEM)
    out = pl.pallas_call(
        functools.partial(asl_lstm_kernel, T=T, B=B, H=H),
        out_shape=jax.ShapeDtypeStruct((B, C_PAD), jnp.float32),
        in_specs=[vmem(), vmem()],     # whole arrays resident in VMEM (2 DMAs)
        out_specs=vmem(),
    )(x2d, slab)

    return out[:, :C]


def init_params(key, input_size=INPUT_SIZE, hidden=HIDDEN, num_classes=NUM_CLASSES):
    """Deterministic synthetic parameters (PyTorch-style uniform init).

    Weights stored transposed as (feat_in, 4H), gate order i, f, g, o; the two
    LSTM biases (b_ih + b_hh) are pre-fused.
    """
    H = hidden
    k = 1.0 / jnp.sqrt(jnp.float32(H))
    ks = jax.random.split(key, 10)
    u = lambda kk, shape: jax.random.uniform(kk, shape, jnp.float32, -k, k)

    wih0 = u(ks[0], (input_size, 4 * H))
    whh0 = u(ks[1], (H, 4 * H))
    b0 = u(ks[2], (1, 4 * H)) + u(ks[3], (1, 4 * H))
    wih1 = u(ks[4], (H, 4 * H))
    whh1 = u(ks[5], (H, 4 * H))
    b1 = u(ks[6], (1, 4 * H)) + u(ks[7], (1, 4 * H))
    wc = jax.random.uniform(ks[8], (H, num_classes), jnp.float32, -k, k)
    bc = jax.random.uniform(ks[9], (1, num_classes), jnp.float32, -k, k)
    return dict(wih0=wih0, whh0=whh0, b0=b0, wih1=wih1, whh1=whh1, b1=b1,
                wc=wc, bc=bc)


def reference_forward(x, p):
    """Pure-JAX reference matching nn.LSTM (batch_first) + Linear on hn[-1]."""
    B, T, I = x.shape
    H = p["whh0"].shape[0]

    def cell(x_t, h, c, wih, whh, b):
        g = x_t @ wih + h @ whh + b
        i_g, f_g, g_g, o_g = jnp.split(g, 4, axis=-1)
        c_new = jax.nn.sigmoid(f_g) * c + jax.nn.sigmoid(i_g) * jnp.tanh(g_g)
        h_new = jax.nn.sigmoid(o_g) * jnp.tanh(c_new)
        return h_new, c_new

    def step(carry, x_t):
        h0, c0, h1, c1 = carry
        h0, c0 = cell(x_t, h0, c0, p["wih0"], p["whh0"], p["b0"])
        h1, c1 = cell(h0, h1, c1, p["wih1"], p["whh1"], p["b1"])
        return (h0, c0, h1, c1), None

    init = tuple(jnp.zeros((B, H), jnp.float32) for _ in range(4))
    (h0, c0, h1, c1), _ = jax.lax.scan(step, init, jnp.transpose(x, (1, 0, 2)))
    return h1 @ p["wc"] + p["bc"]


if __name__ == "__main__":
    B, T = 2, 8
    key = jax.random.PRNGKey(0)
    kx, kp = jax.random.split(key)
    x = jax.random.normal(kx, (B, T, INPUT_SIZE), jnp.float32)
    params = init_params(kp)

    out = jax.block_until_ready(asl_lstm_forward(x, params))
    ref = reference_forward(x, params)

    assert out.shape == (B, NUM_CLASSES)
    assert jnp.allclose(out, ref, rtol=1e-3, atol=1e-4), "mismatch vs reference"

    print("KERNEL_OK")
</pallas_src>

<mosaic_0001>
module attributes {stable_mosaic.version = 11 : i64} {
  func.func @asl_lstm_kernel(%arg0: memref<16x8xf32, #tpu.memory_space<vmem>>, %arg1: memref<144x128xf32, #tpu.memory_space<vmem>>, %arg2: memref<2x128xf32, #tpu.memory_space<vmem>>) attributes {dimension_semantics = [], scalar_prefetch = 0 : i64, scratch_operands = 0 : i64, tpu.core_type = #tpu.core_type<tc>} {
    %c0 = arith.constant 0 : index
    %c0_0 = arith.constant 0 : index
    %0 = vector.load %arg1[%c0, %c0_0] : memref<144x128xf32, #tpu.memory_space<vmem>>, vector<8x128xf32>
    %c8 = arith.constant 8 : index
    %c0_1 = arith.constant 0 : index
    %1 = vector.load %arg1[%c8, %c0_1] : memref<144x128xf32, #tpu.memory_space<vmem>>, vector<32x128xf32>
    %c40 = arith.constant 40 : index
    %c0_2 = arith.constant 0 : index
    %2 = vector.load %arg1[%c40, %c0_2] : memref<144x128xf32, #tpu.memory_space<vmem>>, vector<32x128xf32>
    %c72 = arith.constant 72 : index
    %c0_3 = arith.constant 0 : index
    %3 = vector.load %arg1[%c72, %c0_3] : memref<144x128xf32, #tpu.memory_space<vmem>>, vector<32x128xf32>
    %c104 = arith.constant 104 : index
    %c0_4 = arith.constant 0 : index
    %4 = vector.load %arg1[%c104, %c0_4] : memref<144x128xf32, #tpu.memory_space<vmem>>, vector<32x128xf32>
    %c136 = arith.constant 136 : index
    %c0_5 = arith.constant 0 : index
    %5 = vector.load %arg1[%c136, %c0_5] : memref<144x128xf32, #tpu.memory_space<vmem>>, vector<1x128xf32>
    %c137 = arith.constant 137 : index
    %c0_6 = arith.constant 0 : index
    %6 = vector.load %arg1[%c137, %c0_6] : memref<144x128xf32, #tpu.memory_space<vmem>>, vector<1x128xf32>
    %7 = vector.shape_cast %6 : vector<1x128xf32> to vector<1x128xf32>
    %8 = vector.broadcast %7 : vector<1x128xf32> to vector<2x128xf32>
    %c138 = arith.constant 138 : index
    %c0_7 = arith.constant 0 : index
    %9 = vector.load %arg1[%c138, %c0_7] : memref<144x128xf32, #tpu.memory_space<vmem>>, vector<1x128xf32>
    %10 = vector.shape_cast %9 : vector<1x128xf32> to vector<1x128xf32>
    %11 = vector.broadcast %10 : vector<1x128xf32> to vector<2x128xf32>
    %c0_8 = arith.constant 0 : index
    %c0_9 = arith.constant 0 : index
    %12 = vector.load %arg0[%c0_8, %c0_9] : memref<16x8xf32, #tpu.memory_space<vmem>>, vector<16x8xf32>
    %cst = arith.constant dense<0.000000e+00> : vector<16x128xf32>
    %13 = tpu.matmul %12, %0, %cst {dimension_numbers = #tpu.dot_dimension_numbers<[1], [0], [0], [1], [0, 0, 1, 1], [], []>} : vector<16x8xf32>, vector<8x128xf32>, vector<16x128xf32> -> vector<16x128xf32>
    %14 = vector.shape_cast %5 : vector<1x128xf32> to vector<1x128xf32>
    %15 = vector.broadcast %14 : vector<1x128xf32> to vector<16x128xf32>
    %16 = arith.addf %13, %15 : vector<16x128xf32>
    %17 = tpu.iota {dimensions = array<i32: 1>} : vector<2x128xi32>
    %c64_i32 = arith.constant 64 : i32
    %18 = vector.broadcast %c64_i32 : i32 to vector<2x128xi32>
    %19 = arith.cmpi sge, %17, %18 : vector<2x128xi32>
    %c96_i32 = arith.constant 96 : i32
    %20 = vector.broadcast %c96_i32 : i32 to vector<2x128xi32>
    %21 = arith.cmpi slt, %17, %20 : vector<2x128xi32>
    %22 = arith.andi %19, %21 : vector<2x128xi1>
    %cst_10 = arith.constant 0.000000e+00 : f32
    %23 = vector.broadcast %cst_10 : f32 to vector<2x32xf32>
    %cst_11 = arith.constant 0.000000e+00 : f32
    %24 = vector.broadcast %cst_11 : f32 to vector<2x32xf32>
    %25 = vector.extract_strided_slice %16 {offsets = [0, 0], sizes = [2, 128], strides = [1, 1]} : vector<16x128xf32> to vector<2x128xf32>
    %26 = math.tanh %25 : vector<2x128xf32>
    %27 = arith.negf %25 : vector<2x128xf32>
    %28 = math.exp %27 : vector<2x128xf32>
    %cst_12 = arith.constant 1.000000e+00 : f32
    %29 = vector.broadcast %cst_12 : f32 to vector<2x128xf32>
    %30 = arith.addf %29, %28 : vector<2x128xf32>
    %31 = arith.divf %29, %30 : vector<2x128xf32>
    %32 = arith.select %22, %26, %31 : vector<2x128xi1>, vector<2x128xf32>
    %33 = vector.extract_strided_slice %32 {offsets = [0, 0], sizes = [2, 32], strides = [1, 1]} : vector<2x128xf32> to vector<2x32xf32>
    %34 = vector.extract_strided_slice %32 {offsets = [0, 32], sizes = [2, 32], strides = [1, 1]} : vector<2x128xf32> to vector<2x32xf32>
    %35 = vector.extract_strided_slice %32 {offsets = [0, 64], sizes = [2, 32], strides = [1, 1]} : vector<2x128xf32> to vector<2x32xf32>
    %36 = vector.extract_strided_slice %32 {offsets = [0, 96], sizes = [2, 32], strides = [1, 1]} : vector<2x128xf32> to vector<2x32xf32>
    %37 = arith.mulf %34, %23 : vector<2x32xf32>
    %38 = arith.mulf %33, %35 : vector<2x32xf32>
    %39 = arith.addf %37, %38 : vector<2x32xf32>
    %40 = math.tanh %39 : vector<2x32xf32>
    %41 = arith.mulf %36, %40 : vector<2x32xf32>
    %cst_13 = arith.constant dense<0.000000e+00> : vector<2x128xf32>
    %42 = tpu.matmul %41, %2, %cst_13 {dimension_numbers = #tpu.dot_dimension_numbers<[1], [0], [0], [1], [0, 0, 1, 1], [], []>} : vector<2x32xf32>, vector<32x128xf32>, vector<2x128xf32> -> vector<2x128xf32>
    %43 = arith.addf %42, %8 : vector<2x128xf32>
    %44 = math.tanh %43 : vector<2x128xf32>
    %45 = arith.negf %43 : vector<2x128xf32>
    %46 = math.exp %45 : vector<2x128xf32>
    %cst_14 = arith.constant 1.000000e+00 : f32
    %47 = vector.broadcast %cst_14 : f32 to vector<2x128xf32>
    %48 = arith.addf %47, %46 : vector<2x128xf32>
    %49 = arith.divf %47, %48 : vector<2x128xf32>
    %50 = arith.select %22, %44, %49 : vector<2x128xi1>, vector<2x128xf32>
    %51 = vector.extract_strided_slice %50 {offsets = [0, 0], sizes = [2, 32], strides = [1, 1]} : vector<2x128xf32> to vector<2x32xf32>
    %52 = vector.extract_strided_slice %50 {offsets = [0, 32], sizes = [2, 32], strides = [1, 1]} : vector<2x128xf32> to vector<2x32xf32>
    %53 = vector.extract_strided_slice %50 {offsets = [0, 64], sizes = [2, 32], strides = [1, 1]} : vector<2x128xf32> to vector<2x32xf32>
    %54 = vector.extract_strided_slice %50 {offsets = [0, 96], sizes = [2, 32], strides = [1, 1]} : vector<2x128xf32> to vector<2x32xf32>
    %55 = arith.mulf %52, %24 : vector<2x32xf32>
    %56 = arith.mulf %51, %53 : vector<2x32xf32>
    %57 = arith.addf %55, %56 : vector<2x32xf32>
    %58 = math.tanh %57 : vector<2x32xf32>
    %59 = arith.mulf %54, %58 : vector<2x32xf32>
    %60 = vector.extract_strided_slice %16 {offsets = [2, 0], sizes = [2, 128], strides = [1, 1]} : vector<16x128xf32> to vector<2x128xf32>
    %cst_15 = arith.constant dense<0.000000e+00> : vector<2x128xf32>
    %61 = tpu.matmul %41, %1, %cst_15 {dimension_numbers = #tpu.dot_dimension_numbers<[1], [0], [0], [1], [0, 0, 1, 1], [], []>} : vector<2x32xf32>, vector<32x128xf32>, vector<2x128xf32> -> vector<2x128xf32>
    %62 = arith.addf %60, %61 : vector<2x128xf32>
    %63 = math.tanh %62 : vector<2x128xf32>
    %64 = arith.negf %62 : vector<2x128xf32>
    %65 = math.exp %64 : vector<2x128xf32>
    %cst_16 = arith.constant 1.000000e+00 : f32
    %66 = vector.broadcast %cst_16 : f32 to vector<2x128xf32>
    %67 = arith.addf %66, %65 : vector<2x128xf32>
    %68 = arith.divf %66, %67 : vector<2x128xf32>
    %69 = arith.select %22, %63, %68 : vector<2x128xi1>, vector<2x128xf32>
    %70 = vector.extract_strided_slice %69 {offsets = [0, 0], sizes = [2, 32], strides = [1, 1]} : vector<2x128xf32> to vector<2x32xf32>
    %71 = vector.extract_strided_slice %69 {offsets = [0, 32], sizes = [2, 32], strides = [1, 1]} : vector<2x128xf32> to vector<2x32xf32>
    %72 = vector.extract_strided_slice %69 {offsets = [0, 64], sizes = [2, 32], strides = [1, 1]} : vector<2x128xf32> to vector<2x32xf32>
    %73 = vector.extract_strided_slice %69 {offsets = [0, 96], sizes = [2, 32], strides = [1, 1]} : vector<2x128xf32> to vector<2x32xf32>
    %74 = arith.mulf %71, %39 : vector<2x32xf32>
    %75 = arith.mulf %70, %72 : vector<2x32xf32>
    %76 = arith.addf %74, %75 : vector<2x32xf32>
    %77 = math.tanh %76 : vector<2x32xf32>
    %78 = arith.mulf %73, %77 : vector<2x32xf32>
    %cst_17 = arith.constant dense<0.000000e+00> : vector<2x128xf32>
    %79 = tpu.matmul %59, %3, %cst_17 {dimension_numbers = #tpu.dot_dimension_numbers<[1], [0], [0], [1], [0, 0, 1, 1], [], []>} : vector<2x32xf32>, vector<32x128xf32>, vector<2x128xf32> -> vector<2x128xf32>
    %80 = arith.addf %79, %8 : vector<2x128xf32>
    %cst_18 = arith.constant dense<0.000000e+00> : vector<2x128xf32>
    %81 = tpu.matmul %78, %2, %cst_18 {dimension_numbers = #tpu.dot_dimension_numbers<[1], [0], [0], [1], [0, 0, 1, 1], [], []>} : vector<2x32xf32>, vector<32x128xf32>, vector<2x128xf32> -> vector<2x128xf32>
    %82 = arith.addf %81, %80 : vector<2x128xf32>
    %83 = math.tanh %82 : vector<2x128xf32>
    %84 = arith.negf %82 : vector<2x128xf32>
    %85 = math.exp %84 : vector<2x128xf32>
    %cst_19 = arith.constant 1.000000e+00 : f32
    %86 = vector.broadcast %cst_19 : f32 to vector<2x128xf32>
    %87 = arith.addf %86, %85 : vector<2x128xf32>
    %88 = arith.divf %86, %87 : vector<2x128xf32>
    %89 = arith.select %22, %83, %88 : vector<2x128xi1>, vector<2x128xf32>
    %90 = vector.extract_strided_slice %89 {offsets = [0, 0], sizes = [2, 32], strides = [1, 1]} : vector<2x128xf32> to vector<2x32xf32>
    %91 = vector.extract_strided_slice %89 {offsets = [0, 32], sizes = [2, 32], strides = [1, 1]} : vector<2x128xf32> to vector<2x32xf32>
    %92 = vector.extract_strided_slice %89 {offsets = [0, 64], sizes = [2, 32], strides = [1, 1]} : vector<2x128xf32> to vector<2x32xf32>
    %93 = vector.extract_strided_slice %89 {offsets = [0, 96], sizes = [2, 32], strides = [1, 1]} : vector<2x128xf32> to vector<2x32xf32>
    %94 = arith.mulf %91, %57 : vector<2x32xf32>
    %95 = arith.mulf %90, %92 : vector<2x32xf32>
    %96 = arith.addf %94, %95 : vector<2x32xf32>
    %97 = math.tanh %96 : vector<2x32xf32>
    %98 = arith.mulf %93, %97 : vector<2x32xf32>
    %99 = vector.extract_strided_slice %16 {offsets = [4, 0], sizes = [2, 128], strides = [1, 1]} : vector<16x128xf32> to vector<2x128xf32>
    %cst_20 = arith.constant dense<0.000000e+00> : vector<2x128xf32>
    %100 = tpu.matmul %78, %1, %cst_20 {dimension_numbers = #tpu.dot_dimension_numbers<[1], [0], [0], [1], [0, 0, 1, 1], [], []>} : vector<2x32xf32>, vector<32x128xf32>, vector<2x128xf32> -> vector<2x128xf32>
    %101 = arith.addf %99, %100 : vector<2x128xf32>
    %102 = math.tanh %101 : vector<2x128xf32>
    %103 = arith.negf %101 : vector<2x128xf32>
    %104 = math.exp %103 : vector<2x128xf32>
    %cst_21 = arith.constant 1.000000e+00 : f32
    %105 = vector.broadcast %cst_21 : f32 to vector<2x128xf32>
    %106 = arith.addf %105, %104 : vector<2x128xf32>
    %107 = arith.divf %105, %106 : vector<2x128xf32>
    %108 = arith.select %22, %102, %107 : vector<2x128xi1>, vector<2x128xf32>
    %109 = vector.extract_strided_slice %108 {offsets = [0, 0], sizes = [2, 32], strides = [1, 1]} : vector<2x128xf32> to vector<2x32xf32>
    %110 = vector.extract_strided_slice %108 {offsets = [0, 32], sizes = [2, 32], strides = [1, 1]} : vector<2x128xf32> to vector<2x32xf32>
    %111 = vector.extract_strided_slice %108 {offsets = [0, 64], sizes = [2, 32], strides = [1, 1]} : vector<2x128xf32> to vector<2x32xf32>
    %112 = vector.extract_strided_slice %108 {offsets = [0, 96], sizes = [2, 32], strides = [1, 1]} : vector<2x128xf32> to vector<2x32xf32>
    %113 = arith.mulf %110, %76 : vector<2x32xf32>
    %114 = arith.mulf %109, %111 : vector<2x32xf32>
    %115 = arith.addf %113, %114 : vector<2x32xf32>
    %116 = math.tanh %115 : vector<2x32xf32>
    %117 = arith.mulf %112, %116 : vector<2x32xf32>
    %cst_22 = arith.constant dense<0.000000e+00> : vector<2x128xf32>
    %118 = tpu.matmul %98, %3, %cst_22 {dimension_numbers = #tpu.dot_dimension_numbers<[1], [0], [0], [1], [0, 0, 1, 1], [], []>} : vector<2x32xf32>, vector<32x128xf32>, vector<2x128xf32> -> vector<2x128xf32>
    %119 = arith.addf %118, %8 : vector<2x128xf32>
    %cst_23 = arith.constant dense<0.000000e+00> : vector<2x128xf32>
    %120 = tpu.matmul %117, %2, %cst_23 {dimension_numbers = #tpu.dot_dimension_numbers<[1], [0], [0], [1], [0, 0, 1, 1], [], []>} : vector<2x32xf32>, vector<32x128xf32>, vector<2x128xf32> -> vector<2x128xf32>
    %121 = arith.addf %120, %119 : vector<2x128xf32>
    %122 = math.tanh %121 : vector<2x128xf32>
    %123 = arith.negf %121 : vector<2x128xf32>
    %124 = math.exp %123 : vector<2x128xf32>
    %cst_24 = arith.constant 1.000000e+00 : f32
    %125 = vector.broadcast %cst_24 : f32 to vector<2x128xf32>
    %126 = arith.addf %125, %124 : vector<2x128xf32>
    %127 = arith.divf %125, %126 : vector<2x128xf32>
    %128 = arith.select %22, %122, %127 : vector<2x128xi1>, vector<2x128xf32>
    %129 = vector.extract_strided_slice %128 {offsets = [0, 0], sizes = [2, 32], strides = [1, 1]} : vector<2x128xf32> to vector<2x32xf32>
    %130 = vector.extract_strided_slice %128 {offsets = [0, 32], sizes = [2, 32], strides = [1, 1]} : vector<2x128xf32> to vector<2x32xf32>
    %131 = vector.extract_strided_slice %128 {offsets = [0, 64], sizes = [2, 32], strides = [1, 1]} : vector<2x128xf32> to vector<2x32xf32>
    %132 = vector.extract_strided_slice %128 {offsets = [0, 96], sizes = [2, 32], strides = [1, 1]} : vector<2x128xf32> to vector<2x32xf32>
    %133 = arith.mulf %130, %96 : vector<2x32xf32>
    %134 = arith.mulf %129, %131 : vector<2x32xf32>
    %135 = arith.addf %133, %134 : vector<2x32xf32>
    %136 = math.tanh %135 : vector<2x32xf32>
    %137 = arith.mulf %132, %136 : vector<2x32xf32>
    %138 = vector.extract_strided_slice %16 {offsets = [6, 0], sizes = [2, 128], strides = [1, 1]} : vector<16x128xf32> to vector<2x128xf32>
    %cst_25 = arith.constant dense<0.000000e+00> : vector<2x128xf32>
    %139 = tpu.matmul %117, %1, %cst_25 {dimension_numbers = #tpu.dot_dimension_numbers<[1], [0], [0], [1], [0, 0, 1, 1], [], []>} : vector<2x32xf32>, vector<32x128xf32>, vector<2x128xf32> -> vector<2x128xf32>
    %140 = arith.addf %138, %139 : vector<2x128xf32>
    %141 = math.tanh %140 : vector<2x128xf32>
    %142 = arith.negf %140 : vector<2x128xf32>
    %143 = math.exp %142 : vector<2x128xf32>
    %cst_26 = arith.constant 1.000000e+00 : f32
    %144 = vector.broadcast %cst_26 : f32 to vector<2x128xf32>
    %145 = arith.addf %144, %143 : vector<2x128xf32>
    %146 = arith.divf %144, %145 : vector<2x128xf32>
    %147 = arith.select %22, %141, %146 : vector<2x128xi1>, vector<2x128xf32>
    %148 = vector.extract_strided_slice %147 {offsets = [0, 0], sizes = [2, 32], strides = [1, 1]} : vector<2x128xf32> to vector<2x32xf32>
    %149 = vector.extract_strided_slice %147 {offsets = [0, 32], sizes = [2, 32], strides = [1, 1]} : vector<2x128xf32> to vector<2x32xf32>
    %150 = vector.extract_strided_slice %147 {offsets = [0, 64], sizes = [2, 32], strides = [1, 1]} : vector<2x128xf32> to vector<2x32xf32>
    %151 = vector.extract_strided_slice %147 {offsets = [0, 96], sizes = [2, 32], strides = [1, 1]} : vector<2x128xf32> to vector<2x32xf32>
    %152 = arith.mulf %149, %115 : vector<2x32xf32>
    %153 = arith.mulf %148, %150 : vector<2x32xf32>
    %154 = arith.addf %152, %153 : vector<2x32xf32>
    %155 = math.tanh %154 : vector<2x32xf32>
    %156 = arith.mulf %151, %155 : vector<2x32xf32>
    %cst_27 = arith.constant dense<0.000000e+00> : vector<2x128xf32>
    %157 = tpu.matmul %137, %3, %cst_27 {dimension_numbers = #tpu.dot_dimension_numbers<[1], [0], [0], [1], [0, 0, 1, 1], [], []>} : vector<2x32xf32>, vector<32x128xf32>, vector<2x128xf32> -> vector<2x128xf32>
    %158 = arith.addf %157, %8 : vector<2x128xf32>
    %cst_28 = arith.constant dense<0.000000e+00> : vector<2x128xf32>
    %159 = tpu.matmul %156, %2, %cst_28 {dimension_numbers = #tpu.dot_dimension_numbers<[1], [0], [0], [1], [0, 0, 1, 1], [], []>} : vector<2x32xf32>, vector<32x128xf32>, vector<2x128xf32> -> vector<2x128xf32>
    %160 = arith.addf %159, %158 : vector<2x128xf32>
    %161 = math.tanh %160 : vector<2x128xf32>
    %162 = arith.negf %160 : vector<2x128xf32>
    %163 = math.exp %162 : vector<2x128xf32>
    %cst_29 = arith.constant 1.000000e+00 : f32
    %164 = vector.broadcast %cst_29 : f32 to vector<2x128xf32>
    %165 = arith.addf %164, %163 : vector<2x128xf32>
    %166 = arith.divf %164, %165 : vector<2x128xf32>
    %167 = arith.select %22, %161, %166 : vector<2x128xi1>, vector<2x128xf32>
    %168 = vector.extract_strided_slice %167 {offsets = [0, 0], sizes = [2, 32], strides = [1, 1]} : vector<2x128xf32> to vector<2x32xf32>
    %169 = vector.extract_strided_slice %167 {offsets = [0, 32], sizes = [2, 32], strides = [1, 1]} : vector<2x128xf32> to vector<2x32xf32>
    %170 = vector.extract_strided_slice %167 {offsets = [0, 64], sizes = [2, 32], strides = [1, 1]} : vector<2x128xf32> to vector<2x32xf32>
    %171 = vector.extract_strided_slice %167 {offsets = [0, 96], sizes = [2, 32], strides = [1, 1]} : vector<2x128xf32> to vector<2x32xf32>
    %172 = arith.mulf %169, %135 : vector<2x32xf32>
    %173 = arith.mulf %168, %170 : vector<2x32xf32>
    %174 = arith.addf %172, %173 : vector<2x32xf32>
    %175 = math.tanh %174 : vector<2x32xf32>
    %176 = arith.mulf %171, %175 : vector<2x32xf32>
    %177 = vector.extract_strided_slice %16 {offsets = [8, 0], sizes = [2, 128], strides = [1, 1]} : vector<16x128xf32> to vector<2x128xf32>
    %cst_30 = arith.constant dense<0.000000e+00> : vector<2x128xf32>
    %178 = tpu.matmul %156, %1, %cst_30 {dimension_numbers = #tpu.dot_dimension_numbers<[1], [0], [0], [1], [0, 0, 1, 1], [], []>} : vector<2x32xf32>, vector<32x128xf32>, vector<2x128xf32> -> vector<2x128xf32>
    %179 = arith.addf %177, %178 : vector<2x128xf32>
    %180 = math.tanh %179 : vector<2x128xf32>
    %181 = arith.negf %179 : vector<2x128xf32>
    %182 = math.exp %181 : vector<2x128xf32>
    %cst_31 = arith.constant 1.000000e+00 : f32
    %183 = vector.broadcast %cst_31 : f32 to vector<2x128xf32>
    %184 = arith.addf %183, %182 : vector<2x128xf32>
    %185 = arith.divf %183, %184 : vector<2x128xf32>
    %186 = arith.select %22, %180, %185 : vector<2x128xi1>, vector<2x128xf32>
    %187 = vector.extract_strided_slice %186 {offsets = [0, 0], sizes = [2, 32], strides = [1, 1]} : vector<2x128xf32> to vector<2x32xf32>
    %188 = vector.extract_strided_slice %186 {offsets = [0, 32], sizes = [2, 32], strides = [1, 1]} : vector<2x128xf32> to vector<2x32xf32>
    %189 = vector.extract_strided_slice %186 {offsets = [0, 64], sizes = [2, 32], strides = [1, 1]} : vector<2x128xf32> to vector<2x32xf32>
    %190 = vector.extract_strided_slice %186 {offsets = [0, 96], sizes = [2, 32], strides = [1, 1]} : vector<2x128xf32> to vector<2x32xf32>
    %191 = arith.mulf %188, %154 : vector<2x32xf32>
    %192 = arith.mulf %187, %189 : vector<2x32xf32>
    %193 = arith.addf %191, %192 : vector<2x32xf32>
    %194 = math.tanh %193 : vector<2x32xf32>
    %195 = arith.mulf %190, %194 : vector<2x32xf32>
    %cst_32 = arith.constant dense<0.000000e+00> : vector<2x128xf32>
    %196 = tpu.matmul %176, %3, %cst_32 {dimension_numbers = #tpu.dot_dimension_numbers<[1], [0], [0], [1], [0, 0, 1, 1], [], []>} : vector<2x32xf32>, vector<32x128xf32>, vector<2x128xf32> -> vector<2x128xf32>
    %197 = arith.addf %196, %8 : vector<2x128xf32>
    %cst_33 = arith.constant dense<0.000000e+00> : vector<2x128xf32>
    %198 = tpu.matmul %195, %2, %cst_33 {dimension_numbers = #tpu.dot_dimension_numbers<[1], [0], [0], [1], [0, 0, 1, 1], [], []>} : vector<2x32xf32>, vector<32x128xf32>, vector<2x128xf32> -> vector<2x128xf32>
    %199 = arith.addf %198, %197 : vector<2x128xf32>
    %200 = math.tanh %199 : vector<2x128xf32>
    %201 = arith.negf %199 : vector<2x128xf32>
    %202 = math.exp %201 : vector<2x128xf32>
    %cst_34 = arith.constant 1.000000e+00 : f32
    %203 = vector.broadcast %cst_34 : f32 to vector<2x128xf32>
    %204 = arith.addf %203, %202 : vector<2x128xf32>
    %205 = arith.divf %203, %204 : vector<2x128xf32>
    %206 = arith.select %22, %200, %205 : vector<2x128xi1>, vector<2x128xf32>
    %207 = vector.extract_strided_slice %206 {offsets = [0, 0], sizes = [2, 32], strides = [1, 1]} : vector<2x128xf32> to vector<2x32xf32>
    %208 = vector.extract_strided_slice %206 {offsets = [0, 32], sizes = [2, 32], strides = [1, 1]} : vector<2x128xf32> to vector<2x32xf32>
    %209 = vector.extract_strided_slice %206 {offsets = [0, 64], sizes = [2, 32], strides = [1, 1]} : vector<2x128xf32> to vector<2x32xf32>
    %210 = vector.extract_strided_slice %206 {offsets = [0, 96], sizes = [2, 32], strides = [1, 1]} : vector<2x128xf32> to vector<2x32xf32>
    %211 = arith.mulf %208, %174 : vector<2x32xf32>
    %212 = arith.mulf %207, %209 : vector<2x32xf32>
    %213 = arith.addf %211, %212 : vector<2x32xf32>
    %214 = math.tanh %213 : vector<2x32xf32>
    %215 = arith.mulf %210, %214 : vector<2x32xf32>
    %216 = vector.extract_strided_slice %16 {offsets = [10, 0], sizes = [2, 128], strides = [1, 1]} : vector<16x128xf32> to vector<2x128xf32>
    %cst_35 = arith.constant dense<0.000000e+00> : vector<2x128xf32>
    %217 = tpu.matmul %195, %1, %cst_35 {dimension_numbers = #tpu.dot_dimension_numbers<[1], [0], [0], [1], [0, 0, 1, 1], [], []>} : vector<2x32xf32>, vector<32x128xf32>, vector<2x128xf32> -> vector<2x128xf32>
    %218 = arith.addf %216, %217 : vector<2x128xf32>
    %219 = math.tanh %218 : vector<2x128xf32>
    %220 = arith.negf %218 : vector<2x128xf32>
    %221 = math.exp %220 : vector<2x128xf32>
    %cst_36 = arith.constant 1.000000e+00 : f32
    %222 = vector.broadcast %cst_36 : f32 to vector<2x128xf32>
    %223 = arith.addf %222, %221 : vector<2x128xf32>
    %224 = arith.divf %222, %223 : vector<2x128xf32>
    %225 = arith.select %22, %219, %224 : vector<2x128xi1>, vector<2x128xf32>
    %226 = vector.extract_strided_slice %225 {offsets = [0, 0], sizes = [2, 32], strides = [1, 1]} : vector<2x128xf32> to vector<2x32xf32>
    %227 = vector.extract_strided_slice %225 {offsets = [0, 32], sizes = [2, 32], strides = [1, 1]} : vector<2x128xf32> to vector<2x32xf32>
    %228 = vector.extract_strided_slice %225 {offsets = [0, 64], sizes = [2, 32], strides = [1, 1]} : vector<2x128xf32> to vector<2x32xf32>
    %229 = vector.extract_strided_slice %225 {offsets = [0, 96], sizes = [2, 32], strides = [1, 1]} : vector<2x128xf32> to vector<2x32xf32>
    %230 = arith.mulf %227, %193 : vector<2x32xf32>
    %231 = arith.mulf %226, %228 : vector<2x32xf32>
    %232 = arith.addf %230, %231 : vector<2x32xf32>
    %233 = math.tanh %232 : vector<2x32xf32>
    %234 = arith.mulf %229, %233 : vector<2x32xf32>
    %cst_37 = arith.constant dense<0.000000e+00> : vector<2x128xf32>
    %235 = tpu.matmul %215, %3, %cst_37 {dimension_numbers = #tpu.dot_dimension_numbers<[1], [0], [0], [1], [0, 0, 1, 1], [], []>} : vector<2x32xf32>, vector<32x128xf32>, vector<2x128xf32> -> vector<2x128xf32>
    %236 = arith.addf %235, %8 : vector<2x128xf32>
    %cst_38 = arith.constant dense<0.000000e+00> : vector<2x128xf32>
    %237 = tpu.matmul %234, %2, %cst_38 {dimension_numbers = #tpu.dot_dimension_numbers<[1], [0], [0], [1], [0, 0, 1, 1], [], []>} : vector<2x32xf32>, vector<32x128xf32>, vector<2x128xf32> -> vector<2x128xf32>
    %238 = arith.addf %237, %236 : vector<2x128xf32>
    %239 = math.tanh %238 : vector<2x128xf32>
    %240 = arith.negf %238 : vector<2x128xf32>
    %241 = math.exp %240 : vector<2x128xf32>
    %cst_39 = arith.constant 1.000000e+00 : f32
    %242 = vector.broadcast %cst_39 : f32 to vector<2x128xf32>
    %243 = arith.addf %242, %241 : vector<2x128xf32>
    %244 = arith.divf %242, %243 : vector<2x128xf32>
    %245 = arith.select %22, %239, %244 : vector<2x128xi1>, vector<2x128xf32>
    %246 = vector.extract_strided_slice %245 {offsets = [0, 0], sizes = [2, 32], strides = [1, 1]} : vector<2x128xf32> to vector<2x32xf32>
    %247 = vector.extract_strided_slice %245 {offsets = [0, 32], sizes = [2, 32], strides = [1, 1]} : vector<2x128xf32> to vector<2x32xf32>
    %248 = vector.extract_strided_slice %245 {offsets = [0, 64], sizes = [2, 32], strides = [1, 1]} : vector<2x128xf32> to vector<2x32xf32>
    %249 = vector.extract_strided_slice %245 {offsets = [0, 96], sizes = [2, 32], strides = [1, 1]} : vector<2x128xf32> to vector<2x32xf32>
    %250 = arith.mulf %247, %213 : vector<2x32xf32>
    %251 = arith.mulf %246, %248 : vector<2x32xf32>
    %252 = arith.addf %250, %251 : vector<2x32xf32>
    %253 = math.tanh %252 : vector<2x32xf32>
    %254 = arith.mulf %249, %253 : vector<2x32xf32>
    %255 = vector.extract_strided_slice %16 {offsets = [12, 0], sizes = [2, 128], strides = [1, 1]} : vector<16x128xf32> to vector<2x128xf32>
    %cst_40 = arith.constant dense<0.000000e+00> : vector<2x128xf32>
    %256 = tpu.matmul %234, %1, %cst_40 {dimension_numbers = #tpu.dot_dimension_numbers<[1], [0], [0], [1], [0, 0, 1, 1], [], []>} : vector<2x32xf32>, vector<32x128xf32>, vector<2x128xf32> -> vector<2x128xf32>
    %257 = arith.addf %255, %256 : vector<2x128xf32>
    %258 = math.tanh %257 : vector<2x128xf32>
    %259 = arith.negf %257 : vector<2x128xf32>
    %260 = math.exp %259 : vector<2x128xf32>
    %cst_41 = arith.constant 1.000000e+00 : f32
    %261 = vector.broadcast %cst_41 : f32 to vector<2x128xf32>
    %262 = arith.addf %261, %260 : vector<2x128xf32>
    %263 = arith.divf %261, %262 : vector<2x128xf32>
    %264 = arith.select %22, %258, %263 : vector<2x128xi1>, vector<2x128xf32>
    %265 = vector.extract_strided_slice %264 {offsets = [0, 0], sizes = [2, 32], strides = [1, 1]} : vector<2x128xf32> to vector<2x32xf32>
    %266 = vector.extract_strided_slice %264 {offsets = [0, 32], sizes = [2, 32], strides = [1, 1]} : vector<2x128xf32> to vector<2x32xf32>
    %267 = vector.extract_strided_slice %264 {offsets = [0, 64], sizes = [2, 32], strides = [1, 1]} : vector<2x128xf32> to vector<2x32xf32>
    %268 = vector.extract_strided_slice %264 {offsets = [0, 96], sizes = [2, 32], strides = [1, 1]} : vector<2x128xf32> to vector<2x32xf32>
    %269 = arith.mulf %266, %232 : vector<2x32xf32>
    %270 = arith.mulf %265, %267 : vector<2x32xf32>
    %271 = arith.addf %269, %270 : vector<2x32xf32>
    %272 = math.tanh %271 : vector<2x32xf32>
    %273 = arith.mulf %268, %272 : vector<2x32xf32>
    %cst_42 = arith.constant dense<0.000000e+00> : vector<2x128xf32>
    %274 = tpu.matmul %254, %3, %cst_42 {dimension_numbers = #tpu.dot_dimension_numbers<[1], [0], [0], [1], [0, 0, 1, 1], [], []>} : vector<2x32xf32>, vector<32x128xf32>, vector<2x128xf32> -> vector<2x128xf32>
    %275 = arith.addf %274, %8 : vector<2x128xf32>
    %cst_43 = arith.constant dense<0.000000e+00> : vector<2x128xf32>
    %276 = tpu.matmul %273, %2, %cst_43 {dimension_numbers = #tpu.dot_dimension_numbers<[1], [0], [0], [1], [0, 0, 1, 1], [], []>} : vector<2x32xf32>, vector<32x128xf32>, vector<2x128xf32> -> vector<2x128xf32>
    %277 = arith.addf %276, %275 : vector<2x128xf32>
    %278 = math.tanh %277 : vector<2x128xf32>
    %279 = arith.negf %277 : vector<2x128xf32>
    %280 = math.exp %279 : vector<2x128xf32>
    %cst_44 = arith.constant 1.000000e+00 : f32
    %281 = vector.broadcast %cst_44 : f32 to vector<2x128xf32>
    %282 = arith.addf %281, %280 : vector<2x128xf32>
    %283 = arith.divf %281, %282 : vector<2x128xf32>
    %284 = arith.select %22, %278, %283 : vector<2x128xi1>, vector<2x128xf32>
    %285 = vector.extract_strided_slice %284 {offsets = [0, 0], sizes = [2, 32], strides = [1, 1]} : vector<2x128xf32> to vector<2x32xf32>
    %286 = vector.extract_strided_slice %284 {offsets = [0, 32], sizes = [2, 32], strides = [1, 1]} : vector<2x128xf32> to vector<2x32xf32>
    %287 = vector.extract_strided_slice %284 {offsets = [0, 64], sizes = [2, 32], strides = [1, 1]} : vector<2x128xf32> to vector<2x32xf32>
    %288 = vector.extract_strided_slice %284 {offsets = [0, 96], sizes = [2, 32], strides = [1, 1]} : vector<2x128xf32> to vector<2x32xf32>
    %289 = arith.mulf %286, %252 : vector<2x32xf32>
    %290 = arith.mulf %285, %287 : vector<2x32xf32>
    %291 = arith.addf %289, %290 : vector<2x32xf32>
    %292 = math.tanh %291 : vector<2x32xf32>
    %293 = arith.mulf %288, %292 : vector<2x32xf32>
    %294 = vector.extract_strided_slice %16 {offsets = [14, 0], sizes = [2, 128], strides = [1, 1]} : vector<16x128xf32> to vector<2x128xf32>
    %cst_45 = arith.constant dense<0.000000e+00> : vector<2x128xf32>
    %295 = tpu.matmul %273, %1, %cst_45 {dimension_numbers = #tpu.dot_dimension_numbers<[1], [0], [0], [1], [0, 0, 1, 1], [], []>} : vector<2x32xf32>, vector<32x128xf32>, vector<2x128xf32> -> vector<2x128xf32>
    %296 = arith.addf %294, %295 : vector<2x128xf32>
    %297 = math.tanh %296 : vector<2x128xf32>
    %298 = arith.negf %296 : vector<2x128xf32>
    %299 = math.exp %298 : vector<2x128xf32>
    %cst_46 = arith.constant 1.000000e+00 : f32
    %300 = vector.broadcast %cst_46 : f32 to vector<2x128xf32>
    %301 = arith.addf %300, %299 : vector<2x128xf32>
    %302 = arith.divf %300, %301 : vector<2x128xf32>
    %303 = arith.select %22, %297, %302 : vector<2x128xi1>, vector<2x128xf32>
    %304 = vector.extract_strided_slice %303 {offsets = [0, 0], sizes = [2, 32], strides = [1, 1]} : vector<2x128xf32> to vector<2x32xf32>
    %305 = vector.extract_strided_slice %303 {offsets = [0, 32], sizes = [2, 32], strides = [1, 1]} : vector<2x128xf32> to vector<2x32xf32>
    %306 = vector.extract_strided_slice %303 {offsets = [0, 64], sizes = [2, 32], strides = [1, 1]} : vector<2x128xf32> to vector<2x32xf32>
    %307 = vector.extract_strided_slice %303 {offsets = [0, 96], sizes = [2, 32], strides = [1, 1]} : vector<2x128xf32> to vector<2x32xf32>
    %308 = arith.mulf %305, %271 : vector<2x32xf32>
    %309 = arith.mulf %304, %306 : vector<2x32xf32>
    %310 = arith.addf %308, %309 : vector<2x32xf32>
    %311 = math.tanh %310 : vector<2x32xf32>
    %312 = arith.mulf %307, %311 : vector<2x32xf32>
    %cst_47 = arith.constant dense<0.000000e+00> : vector<2x128xf32>
    %313 = tpu.matmul %293, %3, %cst_47 {dimension_numbers = #tpu.dot_dimension_numbers<[1], [0], [0], [1], [0, 0, 1, 1], [], []>} : vector<2x32xf32>, vector<32x128xf32>, vector<2x128xf32> -> vector<2x128xf32>
    %314 = arith.addf %313, %8 : vector<2x128xf32>
    %cst_48 = arith.constant dense<0.000000e+00> : vector<2x128xf32>
    %315 = tpu.matmul %312, %2, %cst_48 {dimension_numbers = #tpu.dot_dimension_numbers<[1], [0], [0], [1], [0, 0, 1, 1], [], []>} : vector<2x32xf32>, vector<32x128xf32>, vector<2x128xf32> -> vector<2x128xf32>
    %316 = arith.addf %315, %314 : vector<2x128xf32>
    %317 = math.tanh %316 : vector<2x128xf32>
    %318 = arith.negf %316 : vector<2x128xf32>
    %319 = math.exp %318 : vector<2x128xf32>
    %cst_49 = arith.constant 1.000000e+00 : f32
    %320 = vector.broadcast %cst_49 : f32 to vector<2x128xf32>
    %321 = arith.addf %320, %319 : vector<2x128xf32>
    %322 = arith.divf %320, %321 : vector<2x128xf32>
    %323 = arith.select %22, %317, %322 : vector<2x128xi1>, vector<2x128xf32>
    %324 = vector.extract_strided_slice %323 {offsets = [0, 0], sizes = [2, 32], strides = [1, 1]} : vector<2x128xf32> to vector<2x32xf32>
    %325 = vector.extract_strided_slice %323 {offsets = [0, 32], sizes = [2, 32], strides = [1, 1]} : vector<2x128xf32> to vector<2x32xf32>
    %326 = vector.extract_strided_slice %323 {offsets = [0, 64], sizes = [2, 32], strides = [1, 1]} : vector<2x128xf32> to vector<2x32xf32>
    %327 = vector.extract_strided_slice %323 {offsets = [0, 96], sizes = [2, 32], strides = [1, 1]} : vector<2x128xf32> to vector<2x32xf32>
    %328 = arith.mulf %325, %291 : vector<2x32xf32>
    %329 = arith.mulf %324, %326 : vector<2x32xf32>
    %330 = arith.addf %328, %329 : vector<2x32xf32>
    %331 = math.tanh %330 : vector<2x32xf32>
    %332 = arith.mulf %327, %331 : vector<2x32xf32>
    %cst_50 = arith.constant dense<0.000000e+00> : vector<2x128xf32>
    %333 = tpu.matmul %332, %4, %cst_50 {dimension_numbers = #tpu.dot_dimension_numbers<[1], [0], [0], [1], [0, 0, 1, 1], [], []>} : vector<2x32xf32>, vector<32x128xf32>, vector<2x128xf32> -> vector<2x128xf32>
    %334 = arith.addf %333, %11 : vector<2x128xf32>
    %c0_51 = arith.constant 0 : index
    %c0_52 = arith.constant 0 : index
    %335 = vector.load %arg2[%c0_51, %c0_52] : memref<2x128xf32, #tpu.memory_space<vmem>>, vector<2x128xf32>
    tpu.vector_store %arg2[%c0_51, %c0_52], %334 {strides = array<i32>} : memref<2x128xf32, #tpu.memory_space<vmem>>, vector<2x128xf32>,
    return
  }
}

</mosaic_0001>

<llo_original>
// kernel: tpu_custom_call.1
$region0: #{tpu_custom_call.1}
  #allocation0 [shape = 'u32[]', space=smem, size = 0x4, offset = 0x4, fixed_abs, tag = 'smem constant byte address 0x4 - core index']
  #allocation1 [shape = 'u32[144,128]{1,0:T(1,128)}', space=vmem, size = 0x12000, scoped, tag = 'internal scratch']
  %s0 = inlined_call_operand.vmem [shape: f32[16,8], index: 0, kind: input, shape index: {}]
  %s1 = inlined_call_operand.hbm [shape: f32[144,128], index: 1, kind: input, shape index: {}]
  %s2 = inlined_call_operand.hbm [shape: f32[2,128], index: 2, kind: output, shape index: {}]
  %s3 = sld [smem:[#allocation0]]
  $region22: #{tpu_custom_call.1} parent=0
    _
  %s5 = ssub.s32 1, %s3
  %s6 = scalar_select 0, %s5, %s3
  $region1: #{tpu_custom_call.1} parent=0
    #allocation2 [shape = 'u8[73728]{0}', space=vmem, size = 0x12000, scoped, tag = 'input window, operand 1, single buffered']
    #allocation3 [shape = 's32[1]{0}', space=sflag, size = 0x4, scoped, tag = 'scoped memory for tpu_custom_call.1']
    #allocation4 [shape = 's32[1]{0}', space=sflag, size = 0x4, scoped, tag = 'scoped memory for tpu_custom_call.1']
    #allocation5 [shape = 'u8[1024]{0}', space=vmem, size = 0x400, scoped, tag = 'output window, operand 0, single buffered']
    %7 = vsyncpa [#allocation3], 0
    %8 = vsyncpa [#allocation4], 0
    // Predicated region
    $region2: #{tpu_custom_call.1} parent=1 // pred_check
      _
    $region3: #{tpu_custom_call.1} parent=1 // pred_check_branch
      %10 = sbr.rel (0) target = $region5
    $region4: #{tpu_custom_call.1} parent=1 // pred_region
      _
    $region5: #{tpu_custom_call.1} parent=1 // pred_fallthru
      _
    // Predicated region
    $region6: #{tpu_custom_call.1} parent=1 // pred_check
      _
    $region7: #{tpu_custom_call.1} parent=1 // pred_check_branch
      %12 = sbr.rel (0) target = $region9
    $region8: #{tpu_custom_call.1} parent=1 // pred_region
      %s14 = ssub.s32 2304, 2304
      %15 = vsyncadd [#allocation3], %s14
      %s16 = sshll.u32 [#allocation2], 4
      %s17 = int_to_ptr.vmem [resolvable:$true] %s16
      %22 = dma.hbm_to_vmem [thread:$0]  %s1, 2304, %s17, [#allocation3], 128, 128, 8
    $region9: #{tpu_custom_call.1} parent=1 // pred_fallthru
      _
    // Predicated region
    $region10: #{tpu_custom_call.1} parent=1 // pred_check
      _
    $region11: #{tpu_custom_call.1} parent=1 // pred_check_branch
      %24 = sbr.rel (0) target = $region13
    $region12: #{tpu_custom_call.1} parent=1 // pred_region
      %25 = dma.done [#allocation3], 2304
    $region13: #{tpu_custom_call.1} parent=1 // pred_fallthru
      _
    %v26 = vld [vmem:[#allocation2] sm:$0xff]
    %v27 = vld [vmem:[#allocation2 + $0x8] sm:$0xff]
    %v28 = vld [vmem:[#allocation2 + $0x10] sm:$0xff]
    %v29 = vld [vmem:[#allocation2 + $0x18] sm:$0xff]
    %v30 = vld [vmem:[#allocation2 + $0x20] sm:$0xff]
    %v31 = vld [vmem:[#allocation2 + $0x28] sm:$0xff]
    %v32 = vld [vmem:[#allocation2 + $0x30] sm:$0xff]
    %v33 = vld [vmem:[#allocation2 + $0x38] sm:$0xff]
    %v34 = vld [vmem:[#allocation2 + $0x40] sm:$0xff]
    %v35 = vld [vmem:[#allocation2 + $0x48] sm:$0xff]
    %v36 = vld [vmem:[#allocation2 + $0x50] sm:$0xff]
    %v37 = vld [vmem:[#allocation2 + $0x58] sm:$0xff]
    %v38 = vld [vmem:[#allocation2 + $0x60] sm:$0xff]
    %v39 = vld [vmem:[#allocation2 + $0x68] sm:$0xff]
    %v40 = vld [vmem:[#allocation2 + $0x70] sm:$0xff]
    %v41 = vld [vmem:[#allocation2 + $0x78] sm:$0xff]
    %v42 = vld [vmem:[#allocation2 + $0x80] sm:$0xff]
    %v43 = vld [vmem:[#allocation2 + $0x88] sm:$0x1]
    %v44 = vld [vmem:[#allocation2 + $0x89] sm:$0x1]
    %v45 = vlaneseq
    %v46 = vshrl.u32 %v45, 7
    %v47 = vsub.s32 0, %v46
    %v48 = vrot.slane %v44, %v47
    %v49 = vld [vmem:[#allocation2 + $0x8a] sm:$0x1]
    %v50 = vlaneseq
    %v51 = vshrl.u32 %v50, 7
    %v52 = vsub.s32 0, %v51
    %v53 = vrot.slane %v49, %v52
    %v54 = vld [vmem:[%s0] sm:$0xff]
    %v55 = vld [vmem:[%s0 + $0x8] sm:$0xff]
    %v56 = vlaneseq
    %v57 = vshrl.u32 %v56, 7
    %v58 = vsub.s32 0, %v57
    %v59 = vrot.slane %v43, %v58
    %vm60 = vcmask 64512
    %v62 = vsel %vm60, %v54, 0
    %v65 = vsel %vm60, %v55, 0
    %67 = vmatprep.subr.mxu0 0.0
    %68 = vmatpush1.msra.mxu0 %v26
    %69 = vmatprep.subr.mxu0 0.0
    %70 = vmatpush1.msra.mxu0 0.0
    %71 = vmatprep.subr.mxu0 0.0
    %72 = vmatpush1.msra.mxu0 0.0
    %73 = vmatprep.subr.mxu0 0.0
    %74 = vmatpush1.msra.mxu0 0.0
    %75 = vmatprep.subr.mxu0 0.0
    %76 = vmatpush1.msra.mxu0 0.0
    %77 = vmatprep.subr.mxu0 0.0
    %78 = vmatpush1.msra.mxu0 0.0
    %79 = vmatprep.subr.mxu0 0.0
    %80 = vmatpush1.msra.mxu0 0.0
    %81 = vmatprep.subr.mxu0 0.0
    %82 = vmatpush1.msra.mxu0 0.0
    %83 = vmatprep.subr.mxu0 0.0
    %84 = vmatpush1.msra.mxu0 0.0
    %85 = vmatprep.subr.mxu0 0.0
    %86 = vmatpush1.msra.mxu0 0.0
    %87 = vmatprep.subr.mxu0 0.0
    %88 = vmatpush1.msra.mxu0 0.0
    %89 = vmatprep.subr.mxu0 0.0
    %90 = vmatpush1.msra.mxu0 0.0
    %91 = vmatprep.subr.mxu0 0.0
    %92 = vmatpush1.msra.mxu0 0.0
    %93 = vmatprep.subr.mxu0 0.0
    %94 = vmatpush1.msra.mxu0 0.0
    %95 = vmatprep.subr.mxu0 0.0
    %96 = vmatpush1.msra.mxu0 0.0
    %97 = vmatprep.subr.mxu0 0.0
    %98 = vmatpush1.msra.mxu0 0.0
    %99 = vmatprep.subr.mxu0 0.0
    %100 = vmatpush1.msra.mxu0 0.0
    %101 = vmatprep.subr.mxu0 0.0
    %102 = vmatpush1.msra.mxu0 0.0
    %103 = vmatprep.subr.mxu0 0.0
    %104 = vmatpush1.msra.mxu0 0.0
    %105 = vmatprep.subr.mxu0 0.0
    %106 = vmatpush1.msra.mxu0 0.0
    %107 = vmatprep.subr.mxu0 0.0
    %108 = vmatpush1.msra.mxu0 0.0
    %109 = vmatprep.subr.mxu0 0.0
    %110 = vmatpush1.msra.mxu0 0.0
    %111 = vmatprep.subr.mxu0 0.0
    %112 = vmatpush1.msra.mxu0 0.0
    %113 = vmatprep.subr.mxu0 0.0
    %114 = vmatpush1.msra.mxu0 0.0
    %115 = vmatprep.subr.mxu0 0.0
    %116 = vmatpush1.msra.mxu0 0.0
    %117 = vmatprep.subr.mxu0 0.0
    %118 = vmatpush1.msra.mxu0 0.0
    %119 = vmatprep.subr.mxu0 0.0
    %120 = vmatpush1.msra.mxu0 0.0
    %121 = vmatprep.subr.mxu0 0.0
    %122 = vmatpush1.msra.mxu0 0.0
    %123 = vmatprep.subr.mxu0 0.0
    %124 = vmatpush1.msra.mxu0 0.0
    %125 = vmatprep.subr.mxu0 0.0
    %126 = vmatpush1.msra.mxu0 0.0
    %127 = vmatprep.subr.mxu0 0.0
    %128 = vmatpush1.msra.mxu0 0.0
    %129 = vmatprep.subr.mxu0 0.0
    %130 = vmatpush1.msra.mxu0 0.0
    %131 = vmatprep.mubr.f32.mxu0 0.0
    %132 = vmatmul.mubr.f32.gmra.mrb[0].mxu0 %v62
    %v133 = vpop.f32.mrb[0].mxu0
    %v134 = vadd.f32 %v59, %v133
    %v135 = vpop.f32.mrb[0].mxu0
    %136 = vmatprep.mubr.f32.mxu0 0.0
    %137 = vmatmul.mubr.f32.gmra.mrb[0].mxu0 %v65
    %v138 = vpop.f32.mrb[0].mxu0
    %v139 = vadd.f32 %v59, %v138
    %v140 = vpop.f32.mrb[0].mxu0
    %141 = vdwg.mxu0
    %v142 = vlaneseq
    %v143 = vand.u32 %v142, 127
    %vm144 = vcmp.ge.s32.totalorder %v143, 64
    %vm145 = vcmp.lt.s32.totalorder %v143, 96
    %vm146 = vmand %vm144, %vm145
    %v147 = vtanh.pop %v134
    %v148 = vxor.u32 %v134, 2147483648
    %v149 = vmul.f32 %v148, 1.442695
    %v150 = vpow.pop %v149
    %v151 = vadd.f32 %v150, 1.0
    %v152 = vrcp.pop %v151
    %v153 = vmul.f32 1.0, %v152
    %v154 = vsel %vm146, %v147, %v153
    %v155 = vmul.f32 %v154, 0.0
    %157 = vrot.lane.b32.xlu0 %v154, 64
    %v158 = vpop.permute.xlu0 %157
    %v160 = vmul.f32 %v154, %v158
    %162 = vrot.lane.b32.xlu0 %v160, 32
    %v163 = vpop.permute.xlu0 %162
    %v165 = vadd.f32 %v155, %v163
    %v166 = vtanh.pop %v165
    %168 = vrot.lane.b32.xlu0 %v166, 64
    %v169 = vpop.permute.xlu0 %168
    %v171 = vmul.f32 %v154, %v169
    %173 = vrot.lane.b32.xlu0 %v171, 32
    %v174 = vpop.permute.xlu0 %173
    %vm175 = vcmask 261120
    %v176 = vsel %vm175, %v174, 0
    %178 = vmatprep.subr.mxu0 0.0
    %179 = vmatpush1.msra.mxu0 %v31
    %180 = vmatprep.subr.mxu0 0.0
    %181 = vmatpush1.msra.mxu0 %v32
    %182 = vmatprep.subr.mxu0 0.0
    %183 = vmatpush1.msra.mxu0 %v33
    %184 = vmatprep.subr.mxu0 0.0
    %185 = vmatpush1.msra.mxu0 %v34
    %186 = vmatprep.subr.mxu0 0.0
    %187 = vmatpush1.msra.mxu0 0.0
    %188 = vmatprep.subr.mxu0 0.0
    %189 = vmatpush1.msra.mxu0 0.0
    %190 = vmatprep.subr.mxu0 0.0
    %191 = vmatpush1.msra.mxu0 0.0
    %192 = vmatprep.subr.mxu0 0.0
    %193 = vmatpush1.msra.mxu0 0.0
    %194 = vmatprep.subr.mxu0 0.0
    %195 = vmatpush1.msra.mxu0 0.0
    %196 = vmatprep.subr.mxu0 0.0
    %197 = vmatpush1.msra.mxu0 0.0
    %198 = vmatprep.subr.mxu0 0.0
    %199 = vmatpush1.msra.mxu0 0.0
    %200 = vmatprep.subr.mxu0 0.0
    %201 = vmatpush1.msra.mxu0 0.0
    %202 = vmatprep.subr.mxu0 0.0
    %203 = vmatpush1.msra.mxu0 0.0
    %204 = vmatprep.subr.mxu0 0.0
    %205 = vmatpush1.msra.mxu0 0.0
    %206 = vmatprep.subr.mxu0 0.0
    %207 = vmatpush1.msra.mxu0 0.0
    %208 = vmatprep.subr.mxu0 0.0
    %209 = vmatpush1.msra.mxu0 0.0
    %210 = vmatprep.subr.mxu0 0.0
    %211 = vmatpush1.msra.mxu0 0.0
    %212 = vmatprep.subr.mxu0 0.0
    %213 = vmatpush1.msra.mxu0 0.0
    %214 = vmatprep.subr.mxu0 0.0
    %215 = vmatpush1.msra.mxu0 0.0
    %216 = vmatprep.subr.mxu0 0.0
    %217 = vmatpush1.msra.mxu0 0.0
    %218 = vmatprep.subr.mxu0 0.0
    %219 = vmatpush1.msra.mxu0 0.0
    %220 = vmatprep.subr.mxu0 0.0
    %221 = vmatpush1.msra.mxu0 0.0
    %222 = vmatprep.subr.mxu0 0.0
    %223 = vmatpush1.msra.mxu0 0.0
    %224 = vmatprep.subr.mxu0 0.0
    %225 = vmatpush1.msra.mxu0 0.0
    %226 = vmatprep.subr.mxu0 0.0
    %227 = vmatpush1.msra.mxu0 0.0
    %228 = vmatprep.subr.mxu0 0.0
    %229 = vmatpush1.msra.mxu0 0.0
    %230 = vmatprep.subr.mxu0 0.0
    %231 = vmatpush1.msra.mxu0 0.0
    %232 = vmatprep.subr.mxu0 0.0
    %233 = vmatpush1.msra.mxu0 0.0
    %234 = vmatprep.subr.mxu0 0.0
    %235 = vmatpush1.msra.mxu0 0.0
    %236 = vmatprep.subr.mxu0 0.0
    %237 = vmatpush1.msra.mxu0 0.0
    %238 = vmatprep.subr.mxu0 0.0
    %239 = vmatpush1.msra.mxu0 0.0
    %240 = vmatprep.subr.mxu0 0.0
    %241 = vmatpush1.msra.mxu0 0.0
    %242 = vmatprep.mubr.f32.mxu0 0.0
    %243 = vmatmul.mubr.f32.gmra.mrb[0].mxu0 %v176
    %v244 = vpop.f32.mrb[0].mxu0
    %v245 = vadd.f32 %v48, %v244
    %v246 = vpop.f32.mrb[0].mxu0
    %247 = vdwg.mxu0
    %v248 = vtanh.pop %v245
    %v249 = vxor.u32 %v245, 2147483648
    %v250 = vmul.f32 %v249, 1.442695
    %v251 = vpow.pop %v250
    %v252 = vadd.f32 %v251, 1.0
    %v253 = vrcp.pop %v252
    %v254 = vmul.f32 1.0, %v253
    %v255 = vsel %vm146, %v248, %v254
    %v256 = vmul.f32 %v255, 0.0
    %258 = vrot.lane.b32.xlu0 %v255, 64
    %v259 = vpop.permute.xlu0 %258
    %v261 = vmul.f32 %v255, %v259
    %263 = vrot.lane.b32.xlu0 %v261, 32
    %v264 = vpop.permute.xlu0 %263
    %v266 = vadd.f32 %v256, %v264
    %v267 = vtanh.pop %v266
    %269 = vrot.lane.b32.xlu0 %v267, 64
    %v270 = vpop.permute.xlu0 %269
    %v272 = vmul.f32 %v255, %v270
    %273 = vmatprep.subr.mxu0 0.0
    %274 = vmatpush1.msra.mxu0 %v27
    %275 = vmatprep.subr.mxu0 0.0
    %276 = vmatpush1.msra.mxu0 %v28
    %277 = vmatprep.subr.mxu0 0.0
    %278 = vmatpush1.msra.mxu0 %v29
    %279 = vmatprep.subr.mxu0 0.0
    %280 = vmatpush1.msra.mxu0 %v30
    %281 = vmatprep.subr.mxu0 0.0
    %282 = vmatpush1.msra.mxu0 0.0
    %283 = vmatprep.subr.mxu0 0.0
    %284 = vmatpush1.msra.mxu0 0.0
    %285 = vmatprep.subr.mxu0 0.0
    %286 = vmatpush1.msra.mxu0 0.0
    %287 = vmatprep.subr.mxu0 0.0
    %288 = vmatpush1.msra.mxu0 0.0
    %289 = vmatprep.subr.mxu0 0.0
    %290 = vmatpush1.msra.mxu0 0.0
    %291 = vmatprep.subr.mxu0 0.0
    %292 = vmatpush1.msra.mxu0 0.0
    %293 = vmatprep.subr.mxu0 0.0
    %294 = vmatpush1.msra.mxu0 0.0
    %295 = vmatprep.subr.mxu0 0.0
    %296 = vmatpush1.msra.mxu0 0.0
    %297 = vmatprep.subr.mxu0 0.0
    %298 = vmatpush1.msra.mxu0 0.0
    %299 = vmatprep.subr.mxu0 0.0
    %300 = vmatpush1.msra.mxu0 0.0
    %301 = vmatprep.subr.mxu0 0.0
    %302 = vmatpush1.msra.mxu0 0.0
    %303 = vmatprep.subr.mxu0 0.0
    %304 = vmatpush1.msra.mxu0 0.0
    %305 = vmatprep.subr.mxu0 0.0
    %306 = vmatpush1.msra.mxu0 0.0
    %307 = vmatprep.subr.mxu0 0.0
    %308 = vmatpush1.msra.mxu0 0.0
    %309 = vmatprep.subr.mxu0 0.0
    %310 = vmatpush1.msra.mxu0 0.0
    %311 = vmatprep.subr.mxu0 0.0
    %312 = vmatpush1.msra.mxu0 0.0
    %313 = vmatprep.subr.mxu0 0.0
    %314 = vmatpush1.msra.mxu0 0.0
    %315 = vmatprep.subr.mxu0 0.0
    %316 = vmatpush1.msra.mxu0 0.0
    %317 = vmatprep.subr.mxu0 0.0
    %318 = vmatpush1.msra.mxu0 0.0
    %319 = vmatprep.subr.mxu0 0.0
    %320 = vmatpush1.msra.mxu0 0.0
    %321 = vmatprep.subr.mxu0 0.0
    %322 = vmatpush1.msra.mxu0 0.0
    %323 = vmatprep.subr.mxu0 0.0
    %324 = vmatpush1.msra.mxu0 0.0
    %325 = vmatprep.subr.mxu0 0.0
    %326 = vmatpush1.msra.mxu0 0.0
    %327 = vmatprep.subr.mxu0 0.0
    %328 = vmatpush1.msra.mxu0 0.0
    %329 = vmatprep.subr.mxu0 0.0
    %330 = vmatpush1.msra.mxu0 0.0
    %331 = vmatprep.subr.mxu0 0.0
    %332 = vmatpush1.msra.mxu0 0.0
    %333 = vmatprep.subr.mxu0 0.0
    %334 = vmatpush1.msra.mxu0 0.0
    %335 = vmatprep.subr.mxu0 0.0
    %336 = vmatpush1.msra.mxu0 0.0
    %337 = vmatprep.mubr.f32.mxu0 0.0
    %338 = vmatmul.mubr.f32.gmra.mrb[0].mxu0 %v176
    %v339 = vpop.f32.mrb[0].mxu0
    %v340 = vadd.f32 0.0, %v339
    %v341 = vpop.f32.mrb[0].mxu0
    %342 = vdwg.mxu0
    %v344 = vrot.slane %v340, 6
    %v346 = vadd.f32 %v134, %v344
    %v347 = vtanh.pop %v346
    %v348 = vxor.u32 %v346, 2147483648
    %v349 = vmul.f32 %v348, 1.442695
    %v350 = vpow.pop %v349
    %v351 = vadd.f32 %v350, 1.0
    %v352 = vrcp.pop %v351
    %v353 = vmul.f32 1.0, %v352
    %v354 = vsel %vm146, %v347, %v353
    %v356 = vrot.slane %v165, 6
    %v358 = vmul.f32 %v354, %v356
    %360 = vrot.lane.b32.xlu0 %v354, 64
    %v361 = vpop.permute.xlu0 %360
    %v363 = vmul.f32 %v354, %v361
    %365 = vrot.lane.b32.xlu0 %v363, 32
    %v366 = vpop.permute.xlu0 %365
    %v368 = vadd.f32 %v358, %v366
    %v369 = vtanh.pop %v368
    %371 = vrot.lane.b32.xlu0 %v369, 64
    %v372 = vpop.permute.xlu0 %371
    %v374 = vmul.f32 %v354, %v372
    %376 = vrot.lane.b32.xlu0 %v272, 32
    %v377 = vpop.permute.xlu0 %376
    %v378 = vsel %vm175, %v377, 0
    %380 = vmatprep.subr.mxu0 0.0
    %381 = vmatpush1.msra.mxu0 %v35
    %382 = vmatprep.subr.mxu0 0.0
    %383 = vmatpush1.msra.mxu0 %v36
    %384 = vmatprep.subr.mxu0 0.0
    %385 = vmatpush1.msra.mxu0 %v37
    %386 = vmatprep.subr.mxu0 0.0
    %387 = vmatpush1.msra.mxu0 %v38
    %388 = vmatprep.subr.mxu0 0.0
    %389 = vmatpush1.msra.mxu0 0.0
    %390 = vmatprep.subr.mxu0 0.0
    %391 = vmatpush1.msra.mxu0 0.0
    %392 = vmatprep.subr.mxu0 0.0
    %393 = vmatpush1.msra.mxu0 0.0
    %394 = vmatprep.subr.mxu0 0.0
    %395 = vmatpush1.msra.mxu0 0.0
    %396 = vmatprep.subr.mxu0 0.0
    %397 = vmatpush1.msra.mxu0 0.0
    %398 = vmatprep.subr.mxu0 0.0
    %399 = vmatpush1.msra.mxu0 0.0
    %400 = vmatprep.subr.mxu0 0.0
    %401 = vmatpush1.msra.mxu0 0.0
    %402 = vmatprep.subr.mxu0 0.0
    %403 = vmatpush1.msra.mxu0 0.0
    %404 = vmatprep.subr.mxu0 0.0
    %405 = vmatpush1.msra.mxu0 0.0
    %406 = vmatprep.subr.mxu0 0.0
    %407 = vmatpush1.msra.mxu0 0.0
    %408 = vmatprep.subr.mxu0 0.0
    %409 = vmatpush1.msra.mxu0 0.0
    %410 = vmatprep.subr.mxu0 0.0
    %411 = vmatpush1.msra.mxu0 0.0
    %412 = vmatprep.subr.mxu0 0.0
    %413 = vmatpush1.msra.mxu0 0.0
    %414 = vmatprep.subr.mxu0 0.0
    %415 = vmatpush1.msra.mxu0 0.0
    %416 = vmatprep.subr.mxu0 0.0
    %417 = vmatpush1.msra.mxu0 0.0
    %418 = vmatprep.subr.mxu0 0.0
    %419 = vmatpush1.msra.mxu0 0.0
    %420 = vmatprep.subr.mxu0 0.0
    %421 = vmatpush1.msra.mxu0 0.0
    %422 = vmatprep.subr.mxu0 0.0
    %423 = vmatpush1.msra.mxu0 0.0
    %424 = vmatprep.subr.mxu0 0.0
    %425 = vmatpush1.msra.mxu0 0.0
    %426 = vmatprep.subr.mxu0 0.0
    %427 = vmatpush1.msra.mxu0 0.0
    %428 = vmatprep.subr.mxu0 0.0
    %429 = vmatpush1.msra.mxu0 0.0
    %430 = vmatprep.subr.mxu0 0.0
    %431 = vmatpush1.msra.mxu0 0.0
    %432 = vmatprep.subr.mxu0 0.0
    %433 = vmatpush1.msra.mxu0 0.0
    %434 = vmatprep.subr.mxu0 0.0
    %435 = vmatpush1.msra.mxu0 0.0
    %436 = vmatprep.subr.mxu0 0.0
    %437 = vmatpush1.msra.mxu0 0.0
    %438 = vmatprep.subr.mxu0 0.0
    %439 = vmatpush1.msra.mxu0 0.0
    %440 = vmatprep.subr.mxu0 0.0
    %441 = vmatpush1.msra.mxu0 0.0
    %442 = vmatprep.subr.mxu0 0.0
    %443 = vmatpush1.msra.mxu0 0.0
    %444 = vmatprep.mubr.f32.mxu0 0.0
    %445 = vmatmul.mubr.f32.gmra.mrb[0].mxu0 %v378
    %v446 = vpop.f32.mrb[0].mxu0
    %v447 = vadd.f32 %v48, %v446
    %v448 = vpop.f32.mrb[0].mxu0
    %449 = vdwg.mxu0
    %v451 = vrot.slane %v374, 2
    %452 = vrot.lane.b32.xlu0 %v451, 32
    %v453 = vpop.permute.xlu0 %452
    %v454 = vsel %vm175, %v453, 0
    %456 = vmatprep.subr.mxu0 0.0
    %457 = vmatpush1.msra.mxu0 %v31
    %458 = vmatprep.subr.mxu0 0.0
    %459 = vmatpush1.msra.mxu0 %v32
    %460 = vmatprep.subr.mxu0 0.0
    %461 = vmatpush1.msra.mxu0 %v33
    %462 = vmatprep.subr.mxu0 0.0
    %463 = vmatpush1.msra.mxu0 %v34
    %464 = vmatprep.subr.mxu0 0.0
    %465 = vmatpush1.msra.mxu0 0.0
    %466 = vmatprep.subr.mxu0 0.0
    %467 = vmatpush1.msra.mxu0 0.0
    %468 = vmatprep.subr.mxu0 0.0
    %469 = vmatpush1.msra.mxu0 0.0
    %470 = vmatprep.subr.mxu0 0.0
    %471 = vmatpush1.msra.mxu0 0.0
    %472 = vmatprep.subr.mxu0 0.0
    %473 = vmatpush1.msra.mxu0 0.0
    %474 = vmatprep.subr.mxu0 0.0
    %475 = vmatpush1.msra.mxu0 0.0
    %476 = vmatprep.subr.mxu0 0.0
    %477 = vmatpush1.msra.mxu0 0.0
    %478 = vmatprep.subr.mxu0 0.0
    %479 = vmatpush1.msra.mxu0 0.0
    %480 = vmatprep.subr.mxu0 0.0
    %481 = vmatpush1.msra.mxu0 0.0
    %482 = vmatprep.subr.mxu0 0.0
    %483 = vmatpush1.msra.mxu0 0.0
    %484 = vmatprep.subr.mxu0 0.0
    %485 = vmatpush1.msra.mxu0 0.0
    %486 = vmatprep.subr.mxu0 0.0
    %487 = vmatpush1.msra.mxu0 0.0
    %488 = vmatprep.subr.mxu0 0.0
    %489 = vmatpush1.msra.mxu0 0.0
    %490 = vmatprep.subr.mxu0 0.0
    %491 = vmatpush1.msra.mxu0 0.0
    %492 = vmatprep.subr.mxu0 0.0
    %493 = vmatpush1.msra.mxu0 0.0
    %494 = vmatprep.subr.mxu0 0.0
    %495 = vmatpush1.msra.mxu0 0.0
    %496 = vmatprep.subr.mxu0 0.0
    %497 = vmatpush1.msra.mxu0 0.0
    %498 = vmatprep.subr.mxu0 0.0
    %499 = vmatpush1.msra.mxu0 0.0
    %500 = vmatprep.subr.mxu0 0.0
    %501 = vmatpush1.msra.mxu0 0.0
    %502 = vmatprep.subr.mxu0 0.0
    %503 = vmatpush1.msra.mxu0 0.0
    %504 = vmatprep.subr.mxu0 0.0
    %505 = vmatpush1.msra.mxu0 0.0
    %506 = vmatprep.subr.mxu0 0.0
    %507 = vmatpush1.msra.mxu0 0.0
    %508 = vmatprep.subr.mxu0 0.0
    %509 = vmatpush1.msra.mxu0 0.0
    %510 = vmatprep.subr.mxu0 0.0
    %511 = vmatpush1.msra.mxu0 0.0
    %512 = vmatprep.subr.mxu0 0.0
    %513 = vmatpush1.msra.mxu0 0.0
    %514 = vmatprep.subr.mxu0 0.0
    %515 = vmatpush1.msra.mxu0 0.0
    %516 = vmatprep.subr.mxu0 0.0
    %517 = vmatpush1.msra.mxu0 0.0
    %518 = vmatprep.subr.mxu0 0.0
    %519 = vmatpush1.msra.mxu0 0.0
    %520 = vmatprep.mubr.f32.mxu0 0.0
    %521 = vmatmul.mubr.f32.gmra.mrb[0].mxu0 %v454
    %v522 = vpop.f32.mrb[0].mxu0
    %v523 = vadd.f32 %v447, %v522
    %v524 = vpop.f32.mrb[0].mxu0
    %525 = vdwg.mxu0
    %v526 = vtanh.pop %v523
    %v527 = vxor.u32 %v523, 2147483648
    %v528 = vmul.f32 %v527, 1.442695
    %v529 = vpow.pop %v528
    %v530 = vadd.f32 %v529, 1.0
    %v531 = vrcp.pop %v530
    %v532 = vmul.f32 1.0, %v531
    %v533 = vsel %vm146, %v526, %v532
    %v534 = vmul.f32 %v533, %v266
    %536 = vrot.lane.b32.xlu0 %v533, 64
    %v537 = vpop.permute.xlu0 %536
    %v539 = vmul.f32 %v533, %v537
    %541 = vrot.lane.b32.xlu0 %v539, 32
    %v542 = vpop.permute.xlu0 %541
    %v544 = vadd.f32 %v534, %v542
    %v545 = vtanh.pop %v544
    %547 = vrot.lane.b32.xlu0 %v545, 64
    %v548 = vpop.permute.xlu0 %547
    %v550 = vmul.f32 %v533, %v548
    %551 = vmatprep.subr.mxu0 0.0
    %552 = vmatpush1.msra.mxu0 %v27
    %553 = vmatprep.subr.mxu0 0.0
    %554 = vmatpush1.msra.mxu0 %v28
    %555 = vmatprep.subr.mxu0 0.0
    %556 = vmatpush1.msra.mxu0 %v29
    %557 = vmatprep.subr.mxu0 0.0
    %558 = vmatpush1.msra.mxu0 %v30
    %559 = vmatprep.subr.mxu0 0.0
    %560 = vmatpush1.msra.mxu0 0.0
    %561 = vmatprep.subr.mxu0 0.0
    %562 = vmatpush1.msra.mxu0 0.0
    %563 = vmatprep.subr.mxu0 0.0
    %564 = vmatpush1.msra.mxu0 0.0
    %565 = vmatprep.subr.mxu0 0.0
    %566 = vmatpush1.msra.mxu0 0.0
    %567 = vmatprep.subr.mxu0 0.0
    %568 = vmatpush1.msra.mxu0 0.0
    %569 = vmatprep.subr.mxu0 0.0
    %570 = vmatpush1.msra.mxu0 0.0
    %571 = vmatprep.subr.mxu0 0.0
    %572 = vmatpush1.msra.mxu0 0.0
    %573 = vmatprep.subr.mxu0 0.0
    %574 = vmatpush1.msra.mxu0 0.0
    %575 = vmatprep.subr.mxu0 0.0
    %576 = vmatpush1.msra.mxu0 0.0
    %577 = vmatprep.subr.mxu0 0.0
    %578 = vmatpush1.msra.mxu0 0.0
    %579 = vmatprep.subr.mxu0 0.0
    %580 = vmatpush1.msra.mxu0 0.0
    %581 = vmatprep.subr.mxu0 0.0
    %582 = vmatpush1.msra.mxu0 0.0
    %583 = vmatprep.subr.mxu0 0.0
    %584 = vmatpush1.msra.mxu0 0.0
    %585 = vmatprep.subr.mxu0 0.0
    %586 = vmatpush1.msra.mxu0 0.0
    %587 = vmatprep.subr.mxu0 0.0
    %588 = vmatpush1.msra.mxu0 0.0
    %589 = vmatprep.subr.mxu0 0.0
    %590 = vmatpush1.msra.mxu0 0.0
    %591 = vmatprep.subr.mxu0 0.0
    %592 = vmatpush1.msra.mxu0 0.0
    %593 = vmatprep.subr.mxu0 0.0
    %594 = vmatpush1.msra.mxu0 0.0
    %595 = vmatprep.subr.mxu0 0.0
    %596 = vmatpush1.msra.mxu0 0.0
    %597 = vmatprep.subr.mxu0 0.0
    %598 = vmatpush1.msra.mxu0 0.0
    %599 = vmatprep.subr.mxu0 0.0
    %600 = vmatpush1.msra.mxu0 0.0
    %601 = vmatprep.subr.mxu0 0.0
    %602 = vmatpush1.msra.mxu0 0.0
    %603 = vmatprep.subr.mxu0 0.0
    %604 = vmatpush1.msra.mxu0 0.0
    %605 = vmatprep.subr.mxu0 0.0
    %606 = vmatpush1.msra.mxu0 0.0
    %607 = vmatprep.subr.mxu0 0.0
    %608 = vmatpush1.msra.mxu0 0.0
    %609 = vmatprep.subr.mxu0 0.0
    %610 = vmatpush1.msra.mxu0 0.0
    %611 = vmatprep.subr.mxu0 0.0
    %612 = vmatpush1.msra.mxu0 0.0
    %613 = vmatprep.subr.mxu0 0.0
    %614 = vmatpush1.msra.mxu0 0.0
    %615 = vmatprep.mubr.f32.mxu0 0.0
    %616 = vmatmul.mubr.f32.gmra.mrb[0].mxu0 %v454
    %v617 = vpop.f32.mrb[0].mxu0
    %v618 = vadd.f32 0.0, %v617
    %v619 = vpop.f32.mrb[0].mxu0
    %620 = vdwg.mxu0
    %v622 = vrot.slane %v618, 4
    %v624 = vadd.f32 %v134, %v622
    %v625 = vtanh.pop %v624
    %v626 = vxor.u32 %v624, 2147483648
    %v627 = vmul.f32 %v626, 1.442695
    %v628 = vpow.pop %v627
    %v629 = vadd.f32 %v628, 1.0
    %v630 = vrcp.pop %v629
    %v631 = vmul.f32 1.0, %v630
    %v632 = vsel %vm146, %v625, %v631
    %v634 = vrot.slane %v368, 6
    %v636 = vmul.f32 %v632, %v634
    %638 = vrot.lane.b32.xlu0 %v632, 64
    %v639 = vpop.permute.xlu0 %638
    %v641 = vmul.f32 %v632, %v639
    %643 = vrot.lane.b32.xlu0 %v641, 32
    %v644 = vpop.permute.xlu0 %643
    %v646 = vadd.f32 %v636, %v644
    %v647 = vtanh.pop %v646
    %649 = vrot.lane.b32.xlu0 %v647, 64
    %v650 = vpop.permute.xlu0 %649
    %v652 = vmul.f32 %v632, %v650
    %654 = vrot.lane.b32.xlu0 %v550, 32
    %v655 = vpop.permute.xlu0 %654
    %v656 = vsel %vm175, %v655, 0
    %658 = vmatprep.subr.mxu0 0.0
    %659 = vmatpush1.msra.mxu0 %v35
    %660 = vmatprep.subr.mxu0 0.0
    %661 = vmatpush1.msra.mxu0 %v36
    %662 = vmatprep.subr.mxu0 0.0
    %663 = vmatpush1.msra.mxu0 %v37
    %664 = vmatprep.subr.mxu0 0.0
    %665 = vmatpush1.msra.mxu0 %v38
    %666 = vmatprep.subr.mxu0 0.0
    %667 = vmatpush1.msra.mxu0 0.0
    %668 = vmatprep.subr.mxu0 0.0
    %669 = vmatpush1.msra.mxu0 0.0
    %670 = vmatprep.subr.mxu0 0.0
    %671 = vmatpush1.msra.mxu0 0.0
    %672 = vmatprep.subr.mxu0 0.0
    %673 = vmatpush1.msra.mxu0 0.0
    %674 = vmatprep.subr.mxu0 0.0
    %675 = vmatpush1.msra.mxu0 0.0
    %676 = vmatprep.subr.mxu0 0.0
    %677 = vmatpush1.msra.mxu0 0.0
    %678 = vmatprep.subr.mxu0 0.0
    %679 = vmatpush1.msra.mxu0 0.0
    %680 = vmatprep.subr.mxu0 0.0
    %681 = vmatpush1.msra.mxu0 0.0
    %682 = vmatprep.subr.mxu0 0.0
    %683 = vmatpush1.msra.mxu0 0.0
    %684 = vmatprep.subr.mxu0 0.0
    %685 = vmatpush1.msra.mxu0 0.0
    %686 = vmatprep.subr.mxu0 0.0
    %687 = vmatpush1.msra.mxu0 0.0
    %688 = vmatprep.subr.mxu0 0.0
    %689 = vmatpush1.msra.mxu0 0.0
    %690 = vmatprep.subr.mxu0 0.0
    %691 = vmatpush1.msra.mxu0 0.0
    %692 = vmatprep.subr.mxu0 0.0
    %693 = vmatpush1.msra.mxu0 0.0
    %694 = vmatprep.subr.mxu0 0.0
    %695 = vmatpush1.msra.mxu0 0.0
    %696 = vmatprep.subr.mxu0 0.0
    %697 = vmatpush1.msra.mxu0 0.0
    %698 = vmatprep.subr.mxu0 0.0
    %699 = vmatpush1.msra.mxu0 0.0
    %700 = vmatprep.subr.mxu0 0.0
    %701 = vmatpush1.msra.mxu0 0.0
    %702 = vmatprep.subr.mxu0 0.0
    %703 = vmatpush1.msra.mxu0 0.0
    %704 = vmatprep.subr.mxu0 0.0
    %705 = vmatpush1.msra.mxu0 0.0
    %706 = vmatprep.subr.mxu0 0.0
    %707 = vmatpush1.msra.mxu0 0.0
    %708 = vmatprep.subr.mxu0 0.0
    %709 = vmatpush1.msra.mxu0 0.0
    %710 = vmatprep.subr.mxu0 0.0
    %711 = vmatpush1.msra.mxu0 0.0
    %712 = vmatprep.subr.mxu0 0.0
    %713 = vmatpush1.msra.mxu0 0.0
    %714 = vmatprep.subr.mxu0 0.0
    %715 = vmatpush1.msra.mxu0 0.0
    %716 = vmatprep.subr.mxu0 0.0
    %717 = vmatpush1.msra.mxu0 0.0
    %718 = vmatprep.subr.mxu0 0.0
    %719 = vmatpush1.msra.mxu0 0.0
    %720 = vmatprep.subr.mxu0 0.0
    %721 = vmatpush1.msra.mxu0 0.0
    %722 = vmatprep.mubr.f32.mxu0 0.0
    %723 = vmatmul.mubr.f32.gmra.mrb[0].mxu0 %v656
    %v724 = vpop.f32.mrb[0].mxu0
    %v725 = vadd.f32 %v48, %v724
    %v726 = vpop.f32.mrb[0].mxu0
    %727 = vdwg.mxu0
    %v729 = vrot.slane %v652, 4
    %730 = vrot.lane.b32.xlu0 %v729, 32
    %v731 = vpop.permute.xlu0 %730
    %v732 = vsel %vm175, %v731, 0
    %734 = vmatprep.subr.mxu0 0.0
    %735 = vmatpush1.msra.mxu0 %v31
    %736 = vmatprep.subr.mxu0 0.0
    %737 = vmatpush1.msra.mxu0 %v32
    %738 = vmatprep.subr.mxu0 0.0
    %739 = vmatpush1.msra.mxu0 %v33
    %740 = vmatprep.subr.mxu0 0.0
    %741 = vmatpush1.msra.mxu0 %v34
    %742 = vmatprep.subr.mxu0 0.0
    %743 = vmatpush1.msra.mxu0 0.0
    %744 = vmatprep.subr.mxu0 0.0
    %745 = vmatpush1.msra.mxu0 0.0
    %746 = vmatprep.subr.mxu0 0.0
    %747 = vmatpush1.msra.mxu0 0.0
    %748 = vmatprep.subr.mxu0 0.0
    %749 = vmatpush1.msra.mxu0 0.0
    %750 = vmatprep.subr.mxu0 0.0
    %751 = vmatpush1.msra.mxu0 0.0
    %752 = vmatprep.subr.mxu0 0.0
    %753 = vmatpush1.msra.mxu0 0.0
    %754 = vmatprep.subr.mxu0 0.0
    %755 = vmatpush1.msra.mxu0 0.0
    %756 = vmatprep.subr.mxu0 0.0
    %757 = vmatpush1.msra.mxu0 0.0
    %758 = vmatprep.subr.mxu0 0.0
    %759 = vmatpush1.msra.mxu0 0.0
    %760 = vmatprep.subr.mxu0 0.0
    %761 = vmatpush1.msra.mxu0 0.0
    %762 = vmatprep.subr.mxu0 0.0
    %763 = vmatpush1.msra.mxu0 0.0
    %764 = vmatprep.subr.mxu0 0.0
    %765 = vmatpush1.msra.mxu0 0.0
    %766 = vmatprep.subr.mxu0 0.0
    %767 = vmatpush1.msra.mxu0 0.0
    %768 = vmatprep.subr.mxu0 0.0
    %769 = vmatpush1.msra.mxu0 0.0
    %770 = vmatprep.subr.mxu0 0.0
    %771 = vmatpush1.msra.mxu0 0.0
    %772 = vmatprep.subr.mxu0 0.0
    %773 = vmatpush1.msra.mxu0 0.0
    %774 = vmatprep.subr.mxu0 0.0
    %775 = vmatpush1.msra.mxu0 0.0
    %776 = vmatprep.subr.mxu0 0.0
    %777 = vmatpush1.msra.mxu0 0.0
    %778 = vmatprep.subr.mxu0 0.0
    %779 = vmatpush1.msra.mxu0 0.0
    %780 = vmatprep.subr.mxu0 0.0
    %781 = vmatpush1.msra.mxu0 0.0
    %782 = vmatprep.subr.mxu0 0.0
    %783 = vmatpush1.msra.mxu0 0.0
    %784 = vmatprep.subr.mxu0 0.0
    %785 = vmatpush1.msra.mxu0 0.0
    %786 = vmatprep.subr.mxu0 0.0
    %787 = vmatpush1.msra.mxu0 0.0
    %788 = vmatprep.subr.mxu0 0.0
    %789 = vmatpush1.msra.mxu0 0.0
    %790 = vmatprep.subr.mxu0 0.0
    %791 = vmatpush1.msra.mxu0 0.0
    %792 = vmatprep.subr.mxu0 0.0
    %793 = vmatpush1.msra.mxu0 0.0
    %794 = vmatprep.subr.mxu0 0.0
    %795 = vmatpush1.msra.mxu0 0.0
    %796 = vmatprep.subr.mxu0 0.0
    %797 = vmatpush1.msra.mxu0 0.0
    %798 = vmatprep.mubr.f32.mxu0 0.0
    %799 = vmatmul.mubr.f32.gmra.mrb[0].mxu0 %v732
    %v800 = vpop.f32.mrb[0].mxu0
    %v801 = vadd.f32 %v725, %v800
    %v802 = vpop.f32.mrb[0].mxu0
    %803 = vdwg.mxu0
    %v804 = vtanh.pop %v801
    %v805 = vxor.u32 %v801, 2147483648
    %v806 = vmul.f32 %v805, 1.442695
    %v807 = vpow.pop %v806
    %v808 = vadd.f32 %v807, 1.0
    %v809 = vrcp.pop %v808
    %v810 = vmul.f32 1.0, %v809
    %v811 = vsel %vm146, %v804, %v810
    %v812 = vmul.f32 %v811, %v544
    %814 = vrot.lane.b32.xlu0 %v811, 64
    %v815 = vpop.permute.xlu0 %814
    %v817 = vmul.f32 %v811, %v815
    %819 = vrot.lane.b32.xlu0 %v817, 32
    %v820 = vpop.permute.xlu0 %819
    %v822 = vadd.f32 %v812, %v820
    %v823 = vtanh.pop %v822
    %825 = vrot.lane.b32.xlu0 %v823, 64
    %v826 = vpop.permute.xlu0 %825
    %v828 = vmul.f32 %v811, %v826
    %829 = vmatprep.subr.mxu0 0.0
    %830 = vmatpush1.msra.mxu0 %v27
    %831 = vmatprep.subr.mxu0 0.0
    %832 = vmatpush1.msra.mxu0 %v28
    %833 = vmatprep.subr.mxu0 0.0
    %834 = vmatpush1.msra.mxu0 %v29
    %835 = vmatprep.subr.mxu0 0.0
    %836 = vmatpush1.msra.mxu0 %v30
    %837 = vmatprep.subr.mxu0 0.0
    %838 = vmatpush1.msra.mxu0 0.0
    %839 = vmatprep.subr.mxu0 0.0
    %840 = vmatpush1.msra.mxu0 0.0
    %841 = vmatprep.subr.mxu0 0.0
    %842 = vmatpush1.msra.mxu0 0.0
    %843 = vmatprep.subr.mxu0 0.0
    %844 = vmatpush1.msra.mxu0 0.0
    %845 = vmatprep.subr.mxu0 0.0
    %846 = vmatpush1.msra.mxu0 0.0
    %847 = vmatprep.subr.mxu0 0.0
    %848 = vmatpush1.msra.mxu0 0.0
    %849 = vmatprep.subr.mxu0 0.0
    %850 = vmatpush1.msra.mxu0 0.0
    %851 = vmatprep.subr.mxu0 0.0
    %852 = vmatpush1.msra.mxu0 0.0
    %853 = vmatprep.subr.mxu0 0.0
    %854 = vmatpush1.msra.mxu0 0.0
    %855 = vmatprep.subr.mxu0 0.0
    %856 = vmatpush1.msra.mxu0 0.0
    %857 = vmatprep.subr.mxu0 0.0
    %858 = vmatpush1.msra.mxu0 0.0
    %859 = vmatprep.subr.mxu0 0.0
    %860 = vmatpush1.msra.mxu0 0.0
    %861 = vmatprep.subr.mxu0 0.0
    %862 = vmatpush1.msra.mxu0 0.0
    %863 = vmatprep.subr.mxu0 0.0
    %864 = vmatpush1.msra.mxu0 0.0
    %865 = vmatprep.subr.mxu0 0.0
    %866 = vmatpush1.msra.mxu0 0.0
    %867 = vmatprep.subr.mxu0 0.0
    %868 = vmatpush1.msra.mxu0 0.0
    %869 = vmatprep.subr.mxu0 0.0
    %870 = vmatpush1.msra.mxu0 0.0
    %871 = vmatprep.subr.mxu0 0.0
    %872 = vmatpush1.msra.mxu0 0.0
    %873 = vmatprep.subr.mxu0 0.0
    %874 = vmatpush1.msra.mxu0 0.0
    %875 = vmatprep.subr.mxu0 0.0
    %876 = vmatpush1.msra.mxu0 0.0
    %877 = vmatprep.subr.mxu0 0.0
    %878 = vmatpush1.msra.mxu0 0.0
    %879 = vmatprep.subr.mxu0 0.0
    %880 = vmatpush1.msra.mxu0 0.0
    %881 = vmatprep.subr.mxu0 0.0
    %882 = vmatpush1.msra.mxu0 0.0
    %883 = vmatprep.subr.mxu0 0.0
    %884 = vmatpush1.msra.mxu0 0.0
    %885 = vmatprep.subr.mxu0 0.0
    %886 = vmatpush1.msra.mxu0 0.0
    %887 = vmatprep.subr.mxu0 0.0
    %888 = vmatpush1.msra.mxu0 0.0
    %889 = vmatprep.subr.mxu0 0.0
    %890 = vmatpush1.msra.mxu0 0.0
    %891 = vmatprep.subr.mxu0 0.0
    %892 = vmatpush1.msra.mxu0 0.0
    %893 = vmatprep.mubr.f32.mxu0 0.0
    %894 = vmatmul.mubr.f32.gmra.mrb[0].mxu0 %v732
    %v895 = vpop.f32.mrb[0].mxu0
    %v896 = vadd.f32 0.0, %v895
    %v897 = vpop.f32.mrb[0].mxu0
    %898 = vdwg.mxu0
    %v900 = vrot.slane %v896, 2
    %v902 = vadd.f32 %v134, %v900
    %v903 = vtanh.pop %v902
    %v904 = vxor.u32 %v902, 2147483648
    %v905 = vmul.f32 %v904, 1.442695
    %v906 = vpow.pop %v905
    %v907 = vadd.f32 %v906, 1.0
    %v908 = vrcp.pop %v907
    %v909 = vmul.f32 1.0, %v908
    %v910 = vsel %vm146, %v903, %v909
    %v912 = vrot.slane %v646, 6
    %v914 = vmul.f32 %v910, %v912
    %916 = vrot.lane.b32.xlu0 %v910, 64
    %v917 = vpop.permute.xlu0 %916
    %v919 = vmul.f32 %v910, %v917
    %921 = vrot.lane.b32.xlu0 %v919, 32
    %v922 = vpop.permute.xlu0 %921
    %v924 = vadd.f32 %v914, %v922
    %v925 = vtanh.pop %v924
    %927 = vrot.lane.b32.xlu0 %v925, 64
    %v928 = vpop.permute.xlu0 %927
    %v930 = vmul.f32 %v910, %v928
    %932 = vrot.lane.b32.xlu0 %v828, 32
    %v933 = vpop.permute.xlu0 %932
    %v934 = vsel %vm175, %v933, 0
    %936 = vmatprep.subr.mxu0 0.0
    %937 = vmatpush1.msra.mxu0 %v35
    %938 = vmatprep.subr.mxu0 0.0
    %939 = vmatpush1.msra.mxu0 %v36
    %940 = vmatprep.subr.mxu0 0.0
    %941 = vmatpush1.msra.mxu0 %v37
    %942 = vmatprep.subr.mxu0 0.0
    %943 = vmatpush1.msra.mxu0 %v38
    %944 = vmatprep.subr.mxu0 0.0
    %945 = vmatpush1.msra.mxu0 0.0
    %946 = vmatprep.subr.mxu0 0.0
    %947 = vmatpush1.msra.mxu0 0.0
    %948 = vmatprep.subr.mxu0 0.0
    %949 = vmatpush1.msra.mxu0 0.0
    %950 = vmatprep.subr.mxu0 0.0
    %951 = vmatpush1.msra.mxu0 0.0
    %952 = vmatprep.subr.mxu0 0.0
    %953 = vmatpush1.msra.mxu0 0.0
    %954 = vmatprep.subr.mxu0 0.0
    %955 = vmatpush1.msra.mxu0 0.0
    %956 = vmatprep.subr.mxu0 0.0
    %957 = vmatpush1.msra.mxu0 0.0
    %958 = vmatprep.subr.mxu0 0.0
    %959 = vmatpush1.msra.mxu0 0.0
    %960 = vmatprep.subr.mxu0 0.0
    %961 = vmatpush1.msra.mxu0 0.0
    %962 = vmatprep.subr.mxu0 0.0
    %963 = vmatpush1.msra.mxu0 0.0
    %964 = vmatprep.subr.mxu0 0.0
    %965 = vmatpush1.msra.mxu0 0.0
    %966 = vmatprep.subr.mxu0 0.0
    %967 = vmatpush1.msra.mxu0 0.0
    %968 = vmatprep.subr.mxu0 0.0
    %969 = vmatpush1.msra.mxu0 0.0
    %970 = vmatprep.subr.mxu0 0.0
    %971 = vmatpush1.msra.mxu0 0.0
    %972 = vmatprep.subr.mxu0 0.0
    %973 = vmatpush1.msra.mxu0 0.0
    %974 = vmatprep.subr.mxu0 0.0
    %975 = vmatpush1.msra.mxu0 0.0
    %976 = vmatprep.subr.mxu0 0.0
    %977 = vmatpush1.msra.mxu0 0.0
    %978 = vmatprep.subr.mxu0 0.0
    %979 = vmatpush1.msra.mxu0 0.0
    %980 = vmatprep.subr.mxu0 0.0
    %981 = vmatpush1.msra.mxu0 0.0
    %982 = vmatprep.subr.mxu0 0.0
    %983 = vmatpush1.msra.mxu0 0.0
    %984 = vmatprep.subr.mxu0 0.0
    %985 = vmatpush1.msra.mxu0 0.0
    %986 = vmatprep.subr.mxu0 0.0
    %987 = vmatpush1.msra.mxu0 0.0
    %988 = vmatprep.subr.mxu0 0.0
    %989 = vmatpush1.msra.mxu0 0.0
    %990 = vmatprep.subr.mxu0 0.0
    %991 = vmatpush1.msra.mxu0 0.0
    %992 = vmatprep.subr.mxu0 0.0
    %993 = vmatpush1.msra.mxu0 0.0
    %994 = vmatprep.subr.mxu0 0.0
    %995 = vmatpush1.msra.mxu0 0.0
    %996 = vmatprep.subr.mxu0 0.0
    %997 = vmatpush1.msra.mxu0 0.0
    %998 = vmatprep.subr.mxu0 0.0
    %999 = vmatpush1.msra.mxu0 0.0
    %1000 = vmatprep.mubr.f32.mxu0 0.0
    %1001 = vmatmul.mubr.f32.gmra.mrb[0].mxu0 %v934
    %v1002 = vpop.f32.mrb[0].mxu0
    %v1003 = vadd.f32 %v48, %v1002
    %v1004 = vpop.f32.mrb[0].mxu0
    %1005 = vdwg.mxu0
    %v1007 = vrot.slane %v930, 6
    %1008 = vrot.lane.b32.xlu0 %v1007, 32
    %v1009 = vpop.permute.xlu0 %1008
    %v1010 = vsel %vm175, %v1009, 0
    %1012 = vmatprep.subr.mxu0 0.0
    %1013 = vmatpush1.msra.mxu0 %v31
    %1014 = vmatprep.subr.mxu0 0.0
    %1015 = vmatpush1.msra.mxu0 %v32
    %1016 = vmatprep.subr.mxu0 0.0
    %1017 = vmatpush1.msra.mxu0 %v33
    %1018 = vmatprep.subr.mxu0 0.0
    %1019 = vmatpush1.msra.mxu0 %v34
    %1020 = vmatprep.subr.mxu0 0.0
    %1021 = vmatpush1.msra.mxu0 0.0
    %1022 = vmatprep.subr.mxu0 0.0
    %1023 = vmatpush1.msra.mxu0 0.0
    %1024 = vmatprep.subr.mxu0 0.0
    %1025 = vmatpush1.msra.mxu0 0.0
    %1026 = vmatprep.subr.mxu0 0.0
    %1027 = vmatpush1.msra.mxu0 0.0
    %1028 = vmatprep.subr.mxu0 0.0
    %1029 = vmatpush1.msra.mxu0 0.0
    %1030 = vmatprep.subr.mxu0 0.0
    %1031 = vmatpush1.msra.mxu0 0.0
    %1032 = vmatprep.subr.mxu0 0.0
    %1033 = vmatpush1.msra.mxu0 0.0
    %1034 = vmatprep.subr.mxu0 0.0
    %1035 = vmatpush1.msra.mxu0 0.0
    %1036 = vmatprep.subr.mxu0 0.0
    %1037 = vmatpush1.msra.mxu0 0.0
    %1038 = vmatprep.subr.mxu0 0.0
    %1039 = vmatpush1.msra.mxu0 0.0
    %1040 = vmatprep.subr.mxu0 0.0
    %1041 = vmatpush1.msra.mxu0 0.0
    %1042 = vmatprep.subr.mxu0 0.0
    %1043 = vmatpush1.msra.mxu0 0.0
    %1044 = vmatprep.subr.mxu0 0.0
    %1045 = vmatpush1.msra.mxu0 0.0
    %1046 = vmatprep.subr.mxu0 0.0
    %1047 = vmatpush1.msra.mxu0 0.0
    %1048 = vmatprep.subr.mxu0 0.0
    %1049 = vmatpush1.msra.mxu0 0.0
    %1050 = vmatprep.subr.mxu0 0.0
    %1051 = vmatpush1.msra.mxu0 0.0
    %1052 = vmatprep.subr.mxu0 0.0
    %1053 = vmatpush1.msra.mxu0 0.0
    %1054 = vmatprep.subr.mxu0 0.0
    %1055 = vmatpush1.msra.mxu0 0.0
    %1056 = vmatprep.subr.mxu0 0.0
    %1057 = vmatpush1.msra.mxu0 0.0
    %1058 = vmatprep.subr.mxu0 0.0
    %1059 = vmatpush1.msra.mxu0 0.0
    %1060 = vmatprep.subr.mxu0 0.0
    %1061 = vmatpush1.msra.mxu0 0.0
    %1062 = vmatprep.subr.mxu0 0.0
    %1063 = vmatpush1.msra.mxu0 0.0
    %1064 = vmatprep.subr.mxu0 0.0
    %1065 = vmatpush1.msra.mxu0 0.0
    %1066 = vmatprep.subr.mxu0 0.0
    %1067 = vmatpush1.msra.mxu0 0.0
    %1068 = vmatprep.subr.mxu0 0.0
    %1069 = vmatpush1.msra.mxu0 0.0
    %1070 = vmatprep.subr.mxu0 0.0
    %1071 = vmatpush1.msra.mxu0 0.0
    %1072 = vmatprep.subr.mxu0 0.0
    %1073 = vmatpush1.msra.mxu0 0.0
    %1074 = vmatprep.subr.mxu0 0.0
    %1075 = vmatpush1.msra.mxu0 0.0
    %1076 = vmatprep.mubr.f32.mxu0 0.0
    %1077 = vmatmul.mubr.f32.gmra.mrb[0].mxu0 %v1010
    %v1078 = vpop.f32.mrb[0].mxu0
    %v1079 = vadd.f32 %v1003, %v1078
    %v1080 = vpop.f32.mrb[0].mxu0
    %1081 = vdwg.mxu0
    %v1082 = vtanh.pop %v1079
    %v1083 = vxor.u32 %v1079, 2147483648
    %v1084 = vmul.f32 %v1083, 1.442695
    %v1085 = vpow.pop %v1084
    %v1086 = vadd.f32 %v1085, 1.0
    %v1087 = vrcp.pop %v1086
    %v1088 = vmul.f32 1.0, %v1087
    %v1089 = vsel %vm146, %v1082, %v1088
    %v1090 = vmul.f32 %v1089, %v822
    %1092 = vrot.lane.b32.xlu0 %v1089, 64
    %v1093 = vpop.permute.xlu0 %1092
    %v1095 = vmul.f32 %v1089, %v1093
    %1097 = vrot.lane.b32.xlu0 %v1095, 32
    %v1098 = vpop.permute.xlu0 %1097
    %v1100 = vadd.f32 %v1090, %v1098
    %v1101 = vtanh.pop %v1100
    %1103 = vrot.lane.b32.xlu0 %v1101, 64
    %v1104 = vpop.permute.xlu0 %1103
    %v1106 = vmul.f32 %v1089, %v1104
    %1107 = vmatprep.subr.mxu0 0.0
    %1108 = vmatpush1.msra.mxu0 %v27
    %1109 = vmatprep.subr.mxu0 0.0
    %1110 = vmatpush1.msra.mxu0 %v28
    %1111 = vmatprep.subr.mxu0 0.0
    %1112 = vmatpush1.msra.mxu0 %v29
    %1113 = vmatprep.subr.mxu0 0.0
    %1114 = vmatpush1.msra.mxu0 %v30
    %1115 = vmatprep.subr.mxu0 0.0
    %1116 = vmatpush1.msra.mxu0 0.0
    %1117 = vmatprep.subr.mxu0 0.0
    %1118 = vmatpush1.msra.mxu0 0.0
    %1119 = vmatprep.subr.mxu0 0.0
    %1120 = vmatpush1.msra.mxu0 0.0
    %1121 = vmatprep.subr.mxu0 0.0
    %1122 = vmatpush1.msra.mxu0 0.0
    %1123 = vmatprep.subr.mxu0 0.0
    %1124 = vmatpush1.msra.mxu0 0.0
    %1125 = vmatprep.subr.mxu0 0.0
    %1126 = vmatpush1.msra.mxu0 0.0
    %1127 = vmatprep.subr.mxu0 0.0
    %1128 = vmatpush1.msra.mxu0 0.0
    %1129 = vmatprep.subr.mxu0 0.0
    %1130 = vmatpush1.msra.mxu0 0.0
    %1131 = vmatprep.subr.mxu0 0.0
    %1132 = vmatpush1.msra.mxu0 0.0
    %1133 = vmatprep.subr.mxu0 0.0
    %1134 = vmatpush1.msra.mxu0 0.0
    %1135 = vmatprep.subr.mxu0 0.0
    %1136 = vmatpush1.msra.mxu0 0.0
    %1137 = vmatprep.subr.mxu0 0.0
    %1138 = vmatpush1.msra.mxu0 0.0
    %1139 = vmatprep.subr.mxu0 0.0
    %1140 = vmatpush1.msra.mxu0 0.0
    %1141 = vmatprep.subr.mxu0 0.0
    %1142 = vmatpush1.msra.mxu0 0.0
    %1143 = vmatprep.subr.mxu0 0.0
    %1144 = vmatpush1.msra.mxu0 0.0
    %1145 = vmatprep.subr.mxu0 0.0
    %1146 = vmatpush1.msra.mxu0 0.0
    %1147 = vmatprep.subr.mxu0 0.0
    %1148 = vmatpush1.msra.mxu0 0.0
    %1149 = vmatprep.subr.mxu0 0.0
    %1150 = vmatpush1.msra.mxu0 0.0
    %1151 = vmatprep.subr.mxu0 0.0
    %1152 = vmatpush1.msra.mxu0 0.0
    %1153 = vmatprep.subr.mxu0 0.0
    %1154 = vmatpush1.msra.mxu0 0.0
    %1155 = vmatprep.subr.mxu0 0.0
    %1156 = vmatpush1.msra.mxu0 0.0
    %1157 = vmatprep.subr.mxu0 0.0
    %1158 = vmatpush1.msra.mxu0 0.0
    %1159 = vmatprep.subr.mxu0 0.0
    %1160 = vmatpush1.msra.mxu0 0.0
    %1161 = vmatprep.subr.mxu0 0.0
    %1162 = vmatpush1.msra.mxu0 0.0
    %1163 = vmatprep.subr.mxu0 0.0
    %1164 = vmatpush1.msra.mxu0 0.0
    %1165 = vmatprep.subr.mxu0 0.0
    %1166 = vmatpush1.msra.mxu0 0.0
    %1167 = vmatprep.subr.mxu0 0.0
    %1168 = vmatpush1.msra.mxu0 0.0
    %1169 = vmatprep.subr.mxu0 0.0
    %1170 = vmatpush1.msra.mxu0 0.0
    %1171 = vmatprep.mubr.f32.mxu0 0.0
    %1172 = vmatmul.mubr.f32.gmra.mrb[0].mxu0 %v1010
    %v1173 = vpop.f32.mrb[0].mxu0
    %v1174 = vadd.f32 0.0, %v1173
    %v1175 = vpop.f32.mrb[0].mxu0
    %1176 = vdwg.mxu0
    %v1177 = vadd.f32 %v139, %v1174
    %v1178 = vtanh.pop %v1177
    %v1179 = vxor.u32 %v1177, 2147483648
    %v1180 = vmul.f32 %v1179, 1.442695
    %v1181 = vpow.pop %v1180
    %v1182 = vadd.f32 %v1181, 1.0
    %v1183 = vrcp.pop %v1182
    %v1184 = vmul.f32 1.0, %v1183
    %v1185 = vsel %vm146, %v1178, %v1184
    %v1187 = vrot.slane %v924, 6
    %v1189 = vmul.f32 %v1185, %v1187
    %1191 = vrot.lane.b32.xlu0 %v1185, 64
    %v1192 = vpop.permute.xlu0 %1191
    %v1194 = vmul.f32 %v1185, %v1192
    %1196 = vrot.lane.b32.xlu0 %v1194, 32
    %v1197 = vpop.permute.xlu0 %1196
    %v1199 = vadd.f32 %v1189, %v1197
    %v1200 = vtanh.pop %v1199
    %1202 = vrot.lane.b32.xlu0 %v1200, 64
    %v1203 = vpop.permute.xlu0 %1202
    %v1205 = vmul.f32 %v1185, %v1203
    %1207 = vrot.lane.b32.xlu0 %v1106, 32
    %v1208 = vpop.permute.xlu0 %1207
    %v1209 = vsel %vm175, %v1208, 0
    %1211 = vmatprep.subr.mxu0 0.0
    %1212 = vmatpush1.msra.mxu0 %v35
    %1213 = vmatprep.subr.mxu0 0.0
    %1214 = vmatpush1.msra.mxu0 %v36
    %1215 = vmatprep.subr.mxu0 0.0
    %1216 = vmatpush1.msra.mxu0 %v37
    %1217 = vmatprep.subr.mxu0 0.0
    %1218 = vmatpush1.msra.mxu0 %v38
    %1219 = vmatprep.subr.mxu0 0.0
    %1220 = vmatpush1.msra.mxu0 0.0
    %1221 = vmatprep.subr.mxu0 0.0
    %1222 = vmatpush1.msra.mxu0 0.0
    %1223 = vmatprep.subr.mxu0 0.0
    %1224 = vmatpush1.msra.mxu0 0.0
    %1225 = vmatprep.subr.mxu0 0.0
    %1226 = vmatpush1.msra.mxu0 0.0
    %1227 = vmatprep.subr.mxu0 0.0
    %1228 = vmatpush1.msra.mxu0 0.0
    %1229 = vmatprep.subr.mxu0 0.0
    %1230 = vmatpush1.msra.mxu0 0.0
    %1231 = vmatprep.subr.mxu0 0.0
    %1232 = vmatpush1.msra.mxu0 0.0
    %1233 = vmatprep.subr.mxu0 0.0
    %1234 = vmatpush1.msra.mxu0 0.0
    %1235 = vmatprep.subr.mxu0 0.0
    %1236 = vmatpush1.msra.mxu0 0.0
    %1237 = vmatprep.subr.mxu0 0.0
    %1238 = vmatpush1.msra.mxu0 0.0
    %1239 = vmatprep.subr.mxu0 0.0
    %1240 = vmatpush1.msra.mxu0 0.0
    %1241 = vmatprep.subr.mxu0 0.0
    %1242 = vmatpush1.msra.mxu0 0.0
    %1243 = vmatprep.subr.mxu0 0.0
    %1244 = vmatpush1.msra.mxu0 0.0
    %1245 = vmatprep.subr.mxu0 0.0
    %1246 = vmatpush1.msra.mxu0 0.0
    %1247 = vmatprep.subr.mxu0 0.0
    %1248 = vmatpush1.msra.mxu0 0.0
    %1249 = vmatprep.subr.mxu0 0.0
    %1250 = vmatpush1.msra.mxu0 0.0
    %1251 = vmatprep.subr.mxu0 0.0
    %1252 = vmatpush1.msra.mxu0 0.0
    %1253 = vmatprep.subr.mxu0 0.0
    %1254 = vmatpush1.msra.mxu0 0.0
    %1255 = vmatprep.subr.mxu0 0.0
    %1256 = vmatpush1.msra.mxu0 0.0
    %1257 = vmatprep.subr.mxu0 0.0
    %1258 = vmatpush1.msra.mxu0 0.0
    %1259 = vmatprep.subr.mxu0 0.0
    %1260 = vmatpush1.msra.mxu0 0.0
    %1261 = vmatprep.subr.mxu0 0.0
    %1262 = vmatpush1.msra.mxu0 0.0
    %1263 = vmatprep.subr.mxu0 0.0
    %1264 = vmatpush1.msra.mxu0 0.0
    %1265 = vmatprep.subr.mxu0 0.0
    %1266 = vmatpush1.msra.mxu0 0.0
    %1267 = vmatprep.subr.mxu0 0.0
    %1268 = vmatpush1.msra.mxu0 0.0
    %1269 = vmatprep.subr.mxu0 0.0
    %1270 = vmatpush1.msra.mxu0 0.0
    %1271 = vmatprep.subr.mxu0 0.0
    %1272 = vmatpush1.msra.mxu0 0.0
    %1273 = vmatprep.subr.mxu0 0.0
    %1274 = vmatpush1.msra.mxu0 0.0
    %1275 = vmatprep.mubr.f32.mxu0 0.0
    %1276 = vmatmul.mubr.f32.gmra.mrb[0].mxu0 %v1209
    %v1277 = vpop.f32.mrb[0].mxu0
    %v1278 = vadd.f32 %v48, %v1277
    %v1279 = vpop.f32.mrb[0].mxu0
    %1280 = vdwg.mxu0
    %1282 = vrot.lane.b32.xlu0 %v1205, 32
    %v1283 = vpop.permute.xlu0 %1282
    %v1284 = vsel %vm175, %v1283, 0
    %1286 = vmatprep.subr.mxu0 0.0
    %1287 = vmatpush1.msra.mxu0 %v31
    %1288 = vmatprep.subr.mxu0 0.0
    %1289 = vmatpush1.msra.mxu0 %v32
    %1290 = vmatprep.subr.mxu0 0.0
    %1291 = vmatpush1.msra.mxu0 %v33
    %1292 = vmatprep.subr.mxu0 0.0
    %1293 = vmatpush1.msra.mxu0 %v34
    %1294 = vmatprep.subr.mxu0 0.0
    %1295 = vmatpush1.msra.mxu0 0.0
    %1296 = vmatprep.subr.mxu0 0.0
    %1297 = vmatpush1.msra.mxu0 0.0
    %1298 = vmatprep.subr.mxu0 0.0
    %1299 = vmatpush1.msra.mxu0 0.0
    %1300 = vmatprep.subr.mxu0 0.0
    %1301 = vmatpush1.msra.mxu0 0.0
    %1302 = vmatprep.subr.mxu0 0.0
    %1303 = vmatpush1.msra.mxu0 0.0
    %1304 = vmatprep.subr.mxu0 0.0
    %1305 = vmatpush1.msra.mxu0 0.0
    %1306 = vmatprep.subr.mxu0 0.0
    %1307 = vmatpush1.msra.mxu0 0.0
    %1308 = vmatprep.subr.mxu0 0.0
    %1309 = vmatpush1.msra.mxu0 0.0
    %1310 = vmatprep.subr.mxu0 0.0
    %1311 = vmatpush1.msra.mxu0 0.0
    %1312 = vmatprep.subr.mxu0 0.0
    %1313 = vmatpush1.msra.mxu0 0.0
    %1314 = vmatprep.subr.mxu0 0.0
    %1315 = vmatpush1.msra.mxu0 0.0
    %1316 = vmatprep.subr.mxu0 0.0
    %1317 = vmatpush1.msra.mxu0 0.0
    %1318 = vmatprep.subr.mxu0 0.0
    %1319 = vmatpush1.msra.mxu0 0.0
    %1320 = vmatprep.subr.mxu0 0.0
    %1321 = vmatpush1.msra.mxu0 0.0
    %1322 = vmatprep.subr.mxu0 0.0
    %1323 = vmatpush1.msra.mxu0 0.0
    %1324 = vmatprep.subr.mxu0 0.0
    %1325 = vmatpush1.msra.mxu0 0.0
    %1326 = vmatprep.subr.mxu0 0.0
    %1327 = vmatpush1.msra.mxu0 0.0
    %1328 = vmatprep.subr.mxu0 0.0
    %1329 = vmatpush1.msra.mxu0 0.0
    %1330 = vmatprep.subr.mxu0 0.0
    %1331 = vmatpush1.msra.mxu0 0.0
    %1332 = vmatprep.subr.mxu0 0.0
    %1333 = vmatpush1.msra.mxu0 0.0
    %1334 = vmatprep.subr.mxu0 0.0
    %1335 = vmatpush1.msra.mxu0 0.0
    %1336 = vmatprep.subr.mxu0 0.0
    %1337 = vmatpush1.msra.mxu0 0.0
    %1338 = vmatprep.subr.mxu0 0.0
    %1339 = vmatpush1.msra.mxu0 0.0
    %1340 = vmatprep.subr.mxu0 0.0
    %1341 = vmatpush1.msra.mxu0 0.0
    %1342 = vmatprep.subr.mxu0 0.0
    %1343 = vmatpush1.msra.mxu0 0.0
    %1344 = vmatprep.subr.mxu0 0.0
    %1345 = vmatpush1.msra.mxu0 0.0
    %1346 = vmatprep.subr.mxu0 0.0
    %1347 = vmatpush1.msra.mxu0 0.0
    %1348 = vmatprep.subr.mxu0 0.0
    %1349 = vmatpush1.msra.mxu0 0.0
    %1350 = vmatprep.mubr.f32.mxu0 0.0
    %1351 = vmatmul.mubr.f32.gmra.mrb[0].mxu0 %v1284
    %v1352 = vpop.f32.mrb[0].mxu0
    %v1353 = vadd.f32 %v1278, %v1352
    %v1354 = vpop.f32.mrb[0].mxu0
    %1355 = vdwg.mxu0
    %v1356 = vtanh.pop %v1353
    %v1357 = vxor.u32 %v1353, 2147483648
    %v1358 = vmul.f32 %v1357, 1.442695
    %v1359 = vpow.pop %v1358
    %v1360 = vadd.f32 %v1359, 1.0
    %v1361 = vrcp.pop %v1360
    %v1362 = vmul.f32 1.0, %v1361
    %v1363 = vsel %vm146, %v1356, %v1362
    %v1364 = vmul.f32 %v1363, %v1100
    %1366 = vrot.lane.b32.xlu0 %v1363, 64
    %v1367 = vpop.permute.xlu0 %1366
    %v1369 = vmul.f32 %v1363, %v1367
    %1371 = vrot.lane.b32.xlu0 %v1369, 32
    %v1372 = vpop.permute.xlu0 %1371
    %v1374 = vadd.f32 %v1364, %v1372
    %v1375 = vtanh.pop %v1374
    %1377 = vrot.lane.b32.xlu0 %v1375, 64
    %v1378 = vpop.permute.xlu0 %1377
    %v1380 = vmul.f32 %v1363, %v1378
    %1381 = vmatprep.subr.mxu0 0.0
    %1382 = vmatpush1.msra.mxu0 %v27
    %1383 = vmatprep.subr.mxu0 0.0
    %1384 = vmatpush1.msra.mxu0 %v28
    %1385 = vmatprep.subr.mxu0 0.0
    %1386 = vmatpush1.msra.mxu0 %v29
    %1387 = vmatprep.subr.mxu0 0.0
    %1388 = vmatpush1.msra.mxu0 %v30
    %1389 = vmatprep.subr.mxu0 0.0
    %1390 = vmatpush1.msra.mxu0 0.0
    %1391 = vmatprep.subr.mxu0 0.0
    %1392 = vmatpush1.msra.mxu0 0.0
    %1393 = vmatprep.subr.mxu0 0.0
    %1394 = vmatpush1.msra.mxu0 0.0
    %1395 = vmatprep.subr.mxu0 0.0
    %1396 = vmatpush1.msra.mxu0 0.0
    %1397 = vmatprep.subr.mxu0 0.0
    %1398 = vmatpush1.msra.mxu0 0.0
    %1399 = vmatprep.subr.mxu0 0.0
    %1400 = vmatpush1.msra.mxu0 0.0
    %1401 = vmatprep.subr.mxu0 0.0
    %1402 = vmatpush1.msra.mxu0 0.0
    %1403 = vmatprep.subr.mxu0 0.0
    %1404 = vmatpush1.msra.mxu0 0.0
    %1405 = vmatprep.subr.mxu0 0.0
    %1406 = vmatpush1.msra.mxu0 0.0
    %1407 = vmatprep.subr.mxu0 0.0
    %1408 = vmatpush1.msra.mxu0 0.0
    %1409 = vmatprep.subr.mxu0 0.0
    %1410 = vmatpush1.msra.mxu0 0.0
    %1411 = vmatprep.subr.mxu0 0.0
    %1412 = vmatpush1.msra.mxu0 0.0
    %1413 = vmatprep.subr.mxu0 0.0
    %1414 = vmatpush1.msra.mxu0 0.0
    %1415 = vmatprep.subr.mxu0 0.0
    %1416 = vmatpush1.msra.mxu0 0.0
    %1417 = vmatprep.subr.mxu0 0.0
    %1418 = vmatpush1.msra.mxu0 0.0
    %1419 = vmatprep.subr.mxu0 0.0
    %1420 = vmatpush1.msra.mxu0 0.0
    %1421 = vmatprep.subr.mxu0 0.0
    %1422 = vmatpush1.msra.mxu0 0.0
    %1423 = vmatprep.subr.mxu0 0.0
    %1424 = vmatpush1.msra.mxu0 0.0
    %1425 = vmatprep.subr.mxu0 0.0
    %1426 = vmatpush1.msra.mxu0 0.0
    %1427 = vmatprep.subr.mxu0 0.0
    %1428 = vmatpush1.msra.mxu0 0.0
    %1429 = vmatprep.subr.mxu0 0.0
    %1430 = vmatpush1.msra.mxu0 0.0
    %1431 = vmatprep.subr.mxu0 0.0
    %1432 = vmatpush1.msra.mxu0 0.0
    %1433 = vmatprep.subr.mxu0 0.0
    %1434 = vmatpush1.msra.mxu0 0.0
    %1435 = vmatprep.subr.mxu0 0.0
    %1436 = vmatpush1.msra.mxu0 0.0
    %1437 = vmatprep.subr.mxu0 0.0
    %1438 = vmatpush1.msra.mxu0 0.0
    %1439 = vmatprep.subr.mxu0 0.0
    %1440 = vmatpush1.msra.mxu0 0.0
    %1441 = vmatprep.subr.mxu0 0.0
    %1442 = vmatpush1.msra.mxu0 0.0
    %1443 = vmatprep.subr.mxu0 0.0
    %1444 = vmatpush1.msra.mxu0 0.0
    %1445 = vmatprep.mubr.f32.mxu0 0.0
    %1446 = vmatmul.mubr.f32.gmra.mrb[0].mxu0 %v1284
    %v1447 = vpop.f32.mrb[0].mxu0
    %v1448 = vadd.f32 0.0, %v1447
    %v1449 = vpop.f32.mrb[0].mxu0
    %1450 = vdwg.mxu0
    %v1452 = vrot.slane %v1448, 6
    %v1454 = vadd.f32 %v139, %v1452
    %v1455 = vtanh.pop %v1454
    %v1456 = vxor.u32 %v1454, 2147483648
    %v1457 = vmul.f32 %v1456, 1.442695
    %v1458 = vpow.pop %v1457
    %v1459 = vadd.f32 %v1458, 1.0
    %v1460 = vrcp.pop %v1459
    %v1461 = vmul.f32 1.0, %v1460
    %v1462 = vsel %vm146, %v1455, %v1461
    %v1464 = vrot.slane %v1199, 6
    %v1466 = vmul.f32 %v1462, %v1464
    %1468 = vrot.lane.b32.xlu0 %v1462, 64
    %v1469 = vpop.permute.xlu0 %1468
    %v1471 = vmul.f32 %v1462, %v1469
    %1473 = vrot.lane.b32.xlu0 %v1471, 32
    %v1474 = vpop.permute.xlu0 %1473
    %v1476 = vadd.f32 %v1466, %v1474
    %v1477 = vtanh.pop %v1476
    %1479 = vrot.lane.b32.xlu0 %v1477, 64
    %v1480 = vpop.permute.xlu0 %1479
    %v1482 = vmul.f32 %v1462, %v1480
    %1484 = vrot.lane.b32.xlu0 %v1380, 32
    %v1485 = vpop.permute.xlu0 %1484
    %v1486 = vsel %vm175, %v1485, 0
    %1488 = vmatprep.subr.mxu0 0.0
    %1489 = vmatpush1.msra.mxu0 %v35
    %1490 = vmatprep.subr.mxu0 0.0
    %1491 = vmatpush1.msra.mxu0 %v36
    %1492 = vmatprep.subr.mxu0 0.0
    %1493 = vmatpush1.msra.mxu0 %v37
    %1494 = vmatprep.subr.mxu0 0.0
    %1495 = vmatpush1.msra.mxu0 %v38
    %1496 = vmatprep.subr.mxu0 0.0
    %1497 = vmatpush1.msra.mxu0 0.0
    %1498 = vmatprep.subr.mxu0 0.0
    %1499 = vmatpush1.msra.mxu0 0.0
    %1500 = vmatprep.subr.mxu0 0.0
    %1501 = vmatpush1.msra.mxu0 0.0
    %1502 = vmatprep.subr.mxu0 0.0
    %1503 = vmatpush1.msra.mxu0 0.0
    %1504 = vmatprep.subr.mxu0 0.0
    %1505 = vmatpush1.msra.mxu0 0.0
    %1506 = vmatprep.subr.mxu0 0.0
    %1507 = vmatpush1.msra.mxu0 0.0
    %1508 = vmatprep.subr.mxu0 0.0
    %1509 = vmatpush1.msra.mxu0 0.0
    %1510 = vmatprep.subr.mxu0 0.0
    %1511 = vmatpush1.msra.mxu0 0.0
    %1512 = vmatprep.subr.mxu0 0.0
    %1513 = vmatpush1.msra.mxu0 0.0
    %1514 = vmatprep.subr.mxu0 0.0
    %1515 = vmatpush1.msra.mxu0 0.0
    %1516 = vmatprep.subr.mxu0 0.0
    %1517 = vmatpush1.msra.mxu0 0.0
    %1518 = vmatprep.subr.mxu0 0.0
    %1519 = vmatpush1.msra.mxu0 0.0
    %1520 = vmatprep.subr.mxu0 0.0
    %1521 = vmatpush1.msra.mxu0 0.0
    %1522 = vmatprep.subr.mxu0 0.0
    %1523 = vmatpush1.msra.mxu0 0.0
    %1524 = vmatprep.subr.mxu0 0.0
    %1525 = vmatpush1.msra.mxu0 0.0
    %1526 = vmatprep.subr.mxu0 0.0
    %1527 = vmatpush1.msra.mxu0 0.0
    %1528 = vmatprep.subr.mxu0 0.0
    %1529 = vmatpush1.msra.mxu0 0.0
    %1530 = vmatprep.subr.mxu0 0.0
    %1531 = vmatpush1.msra.mxu0 0.0
    %1532 = vmatprep.subr.mxu0 0.0
    %1533 = vmatpush1.msra.mxu0 0.0
    %1534 = vmatprep.subr.mxu0 0.0
    %1535 = vmatpush1.msra.mxu0 0.0
    %1536 = vmatprep.subr.mxu0 0.0
    %1537 = vmatpush1.msra.mxu0 0.0
    %1538 = vmatprep.subr.mxu0 0.0
    %1539 = vmatpush1.msra.mxu0 0.0
    %1540 = vmatprep.subr.mxu0 0.0
    %1541 = vmatpush1.msra.mxu0 0.0
    %1542 = vmatprep.subr.mxu0 0.0
    %1543 = vmatpush1.msra.mxu0 0.0
    %1544 = vmatprep.subr.mxu0 0.0
    %1545 = vmatpush1.msra.mxu0 0.0
    %1546 = vmatprep.subr.mxu0 0.0
    %1547 = vmatpush1.msra.mxu0 0.0
    %1548 = vmatprep.subr.mxu0 0.0
    %1549 = vmatpush1.msra.mxu0 0.0
    %1550 = vmatprep.subr.mxu0 0.0
    %1551 = vmatpush1.msra.mxu0 0.0
    %1552 = vmatprep.mubr.f32.mxu0 0.0
    %1553 = vmatmul.mubr.f32.gmra.mrb[0].mxu0 %v1486
    %v1554 = vpop.f32.mrb[0].mxu0
    %v1555 = vadd.f32 %v48, %v1554
    %v1556 = vpop.f32.mrb[0].mxu0
    %1557 = vdwg.mxu0
    %v1559 = vrot.slane %v1482, 2
    %1560 = vrot.lane.b32.xlu0 %v1559, 32
    %v1561 = vpop.permute.xlu0 %1560
    %v1562 = vsel %vm175, %v1561, 0
    %1564 = vmatprep.subr.mxu0 0.0
    %1565 = vmatpush1.msra.mxu0 %v31
    %1566 = vmatprep.subr.mxu0 0.0
    %1567 = vmatpush1.msra.mxu0 %v32
    %1568 = vmatprep.subr.mxu0 0.0
    %1569 = vmatpush1.msra.mxu0 %v33
    %1570 = vmatprep.subr.mxu0 0.0
    %1571 = vmatpush1.msra.mxu0 %v34
    %1572 = vmatprep.subr.mxu0 0.0
    %1573 = vmatpush1.msra.mxu0 0.0
    %1574 = vmatprep.subr.mxu0 0.0
    %1575 = vmatpush1.msra.mxu0 0.0
    %1576 = vmatprep.subr.mxu0 0.0
    %1577 = vmatpush1.msra.mxu0 0.0
    %1578 = vmatprep.subr.mxu0 0.0
    %1579 = vmatpush1.msra.mxu0 0.0
    %1580 = vmatprep.subr.mxu0 0.0
    %1581 = vmatpush1.msra.mxu0 0.0
    %1582 = vmatprep.subr.mxu0 0.0
    %1583 = vmatpush1.msra.mxu0 0.0
    %1584 = vmatprep.subr.mxu0 0.0
    %1585 = vmatpush1.msra.mxu0 0.0
    %1586 = vmatprep.subr.mxu0 0.0
    %1587 = vmatpush1.msra.mxu0 0.0
    %1588 = vmatprep.subr.mxu0 0.0
    %1589 = vmatpush1.msra.mxu0 0.0
    %1590 = vmatprep.subr.mxu0 0.0
    %1591 = vmatpush1.msra.mxu0 0.0
    %1592 = vmatprep.subr.mxu0 0.0
    %1593 = vmatpush1.msra.mxu0 0.0
    %1594 = vmatprep.subr.mxu0 0.0
    %1595 = vmatpush1.msra.mxu0 0.0
    %1596 = vmatprep.subr.mxu0 0.0
    %1597 = vmatpush1.msra.mxu0 0.0
    %1598 = vmatprep.subr.mxu0 0.0
    %1599 = vmatpush1.msra.mxu0 0.0
    %1600 = vmatprep.subr.mxu0 0.0
    %1601 = vmatpush1.msra.mxu0 0.0
    %1602 = vmatprep.subr.mxu0 0.0
    %1603 = vmatpush1.msra.mxu0 0.0
    %1604 = vmatprep.subr.mxu0 0.0
    %1605 = vmatpush1.msra.mxu0 0.0
    %1606 = vmatprep.subr.mxu0 0.0
    %1607 = vmatpush1.msra.mxu0 0.0
    %1608 = vmatprep.subr.mxu0 0.0
    %1609 = vmatpush1.msra.mxu0 0.0
    %1610 = vmatprep.subr.mxu0 0.0
    %1611 = vmatpush1.msra.mxu0 0.0
    %1612 = vmatprep.subr.mxu0 0.0
    %1613 = vmatpush1.msra.mxu0 0.0
    %1614 = vmatprep.subr.mxu0 0.0
    %1615 = vmatpush1.msra.mxu0 0.0
    %1616 = vmatprep.subr.mxu0 0.0
    %1617 = vmatpush1.msra.mxu0 0.0
    %1618 = vmatprep.subr.mxu0 0.0
    %1619 = vmatpush1.msra.mxu0 0.0
    %1620 = vmatprep.subr.mxu0 0.0
    %1621 = vmatpush1.msra.mxu0 0.0
    %1622 = vmatprep.subr.mxu0 0.0
    %1623 = vmatpush1.msra.mxu0 0.0
    %1624 = vmatprep.subr.mxu0 0.0
    %1625 = vmatpush1.msra.mxu0 0.0
    %1626 = vmatprep.subr.mxu0 0.0
    %1627 = vmatpush1.msra.mxu0 0.0
    %1628 = vmatprep.mubr.f32.mxu0 0.0
    %1629 = vmatmul.mubr.f32.gmra.mrb[0].mxu0 %v1562
    %v1630 = vpop.f32.mrb[0].mxu0
    %v1631 = vadd.f32 %v1555, %v1630
    %v1632 = vpop.f32.mrb[0].mxu0
    %1633 = vdwg.mxu0
    %v1634 = vtanh.pop %v1631
    %v1635 = vxor.u32 %v1631, 2147483648
    %v1636 = vmul.f32 %v1635, 1.442695
    %v1637 = vpow.pop %v1636
    %v1638 = vadd.f32 %v1637, 1.0
    %v1639 = vrcp.pop %v1638
    %v1640 = vmul.f32 1.0, %v1639
    %v1641 = vsel %vm146, %v1634, %v1640
    %v1642 = vmul.f32 %v1641, %v1374
    %1644 = vrot.lane.b32.xlu0 %v1641, 64
    %v1645 = vpop.permute.xlu0 %1644
    %v1647 = vmul.f32 %v1641, %v1645
    %1649 = vrot.lane.b32.xlu0 %v1647, 32
    %v1650 = vpop.permute.xlu0 %1649
    %v1652 = vadd.f32 %v1642, %v1650
    %v1653 = vtanh.pop %v1652
    %1655 = vrot.lane.b32.xlu0 %v1653, 64
    %v1656 = vpop.permute.xlu0 %1655
    %v1658 = vmul.f32 %v1641, %v1656
    %1659 = vmatprep.subr.mxu0 0.0
    %1660 = vmatpush1.msra.mxu0 %v27
    %1661 = vmatprep.subr.mxu0 0.0
    %1662 = vmatpush1.msra.mxu0 %v28
    %1663 = vmatprep.subr.mxu0 0.0
    %1664 = vmatpush1.msra.mxu0 %v29
    %1665 = vmatprep.subr.mxu0 0.0
    %1666 = vmatpush1.msra.mxu0 %v30
    %1667 = vmatprep.subr.mxu0 0.0
    %1668 = vmatpush1.msra.mxu0 0.0
    %1669 = vmatprep.subr.mxu0 0.0
    %1670 = vmatpush1.msra.mxu0 0.0
    %1671 = vmatprep.subr.mxu0 0.0
    %1672 = vmatpush1.msra.mxu0 0.0
    %1673 = vmatprep.subr.mxu0 0.0
    %1674 = vmatpush1.msra.mxu0 0.0
    %1675 = vmatprep.subr.mxu0 0.0
    %1676 = vmatpush1.msra.mxu0 0.0
    %1677 = vmatprep.subr.mxu0 0.0
    %1678 = vmatpush1.msra.mxu0 0.0
    %1679 = vmatprep.subr.mxu0 0.0
    %1680 = vmatpush1.msra.mxu0 0.0
    %1681 = vmatprep.subr.mxu0 0.0
    %1682 = vmatpush1.msra.mxu0 0.0
    %1683 = vmatprep.subr.mxu0 0.0
    %1684 = vmatpush1.msra.mxu0 0.0
    %1685 = vmatprep.subr.mxu0 0.0
    %1686 = vmatpush1.msra.mxu0 0.0
    %1687 = vmatprep.subr.mxu0 0.0
    %1688 = vmatpush1.msra.mxu0 0.0
    %1689 = vmatprep.subr.mxu0 0.0
    %1690 = vmatpush1.msra.mxu0 0.0
    %1691 = vmatprep.subr.mxu0 0.0
    %1692 = vmatpush1.msra.mxu0 0.0
    %1693 = vmatprep.subr.mxu0 0.0
    %1694 = vmatpush1.msra.mxu0 0.0
    %1695 = vmatprep.subr.mxu0 0.0
    %1696 = vmatpush1.msra.mxu0 0.0
    %1697 = vmatprep.subr.mxu0 0.0
    %1698 = vmatpush1.msra.mxu0 0.0
    %1699 = vmatprep.subr.mxu0 0.0
    %1700 = vmatpush1.msra.mxu0 0.0
    %1701 = vmatprep.subr.mxu0 0.0
    %1702 = vmatpush1.msra.mxu0 0.0
    %1703 = vmatprep.subr.mxu0 0.0
    %1704 = vmatpush1.msra.mxu0 0.0
    %1705 = vmatprep.subr.mxu0 0.0
    %1706 = vmatpush1.msra.mxu0 0.0
    %1707 = vmatprep.subr.mxu0 0.0
    %1708 = vmatpush1.msra.mxu0 0.0
    %1709 = vmatprep.subr.mxu0 0.0
    %1710 = vmatpush1.msra.mxu0 0.0
    %1711 = vmatprep.subr.mxu0 0.0
    %1712 = vmatpush1.msra.mxu0 0.0
    %1713 = vmatprep.subr.mxu0 0.0
    %1714 = vmatpush1.msra.mxu0 0.0
    %1715 = vmatprep.subr.mxu0 0.0
    %1716 = vmatpush1.msra.mxu0 0.0
    %1717 = vmatprep.subr.mxu0 0.0
    %1718 = vmatpush1.msra.mxu0 0.0
    %1719 = vmatprep.subr.mxu0 0.0
    %1720 = vmatpush1.msra.mxu0 0.0
    %1721 = vmatprep.subr.mxu0 0.0
    %1722 = vmatpush1.msra.mxu0 0.0
    %1723 = vmatprep.mubr.f32.mxu0 0.0
    %1724 = vmatmul.mubr.f32.gmra.mrb[0].mxu0 %v1562
    %v1725 = vpop.f32.mrb[0].mxu0
    %v1726 = vadd.f32 0.0, %v1725
    %v1727 = vpop.f32.mrb[0].mxu0
    %1728 = vdwg.mxu0
    %v1730 = vrot.slane %v1726, 4
    %v1732 = vadd.f32 %v139, %v1730
    %v1733 = vtanh.pop %v1732
    %v1734 = vxor.u32 %v1732, 2147483648
    %v1735 = vmul.f32 %v1734, 1.442695
    %v1736 = vpow.pop %v1735
    %v1737 = vadd.f32 %v1736, 1.0
    %v1738 = vrcp.pop %v1737
    %v1739 = vmul.f32 1.0, %v1738
    %v1740 = vsel %vm146, %v1733, %v1739
    %v1742 = vrot.slane %v1476, 6
    %v1744 = vmul.f32 %v1740, %v1742
    %1746 = vrot.lane.b32.xlu0 %v1740, 64
    %v1747 = vpop.permute.xlu0 %1746
    %v1749 = vmul.f32 %v1740, %v1747
    %1751 = vrot.lane.b32.xlu0 %v1749, 32
    %v1752 = vpop.permute.xlu0 %1751
    %v1754 = vadd.f32 %v1744, %v1752
    %v1755 = vtanh.pop %v1754
    %1757 = vrot.lane.b32.xlu0 %v1755, 64
    %v1758 = vpop.permute.xlu0 %1757
    %v1760 = vmul.f32 %v1740, %v1758
    %1762 = vrot.lane.b32.xlu0 %v1658, 32
    %v1763 = vpop.permute.xlu0 %1762
    %v1764 = vsel %vm175, %v1763, 0
    %1766 = vmatprep.subr.mxu0 0.0
    %1767 = vmatpush1.msra.mxu0 %v35
    %1768 = vmatprep.subr.mxu0 0.0
    %1769 = vmatpush1.msra.mxu0 %v36
    %1770 = vmatprep.subr.mxu0 0.0
    %1771 = vmatpush1.msra.mxu0 %v37
    %1772 = vmatprep.subr.mxu0 0.0
    %1773 = vmatpush1.msra.mxu0 %v38
    %1774 = vmatprep.subr.mxu0 0.0
    %1775 = vmatpush1.msra.mxu0 0.0
    %1776 = vmatprep.subr.mxu0 0.0
    %1777 = vmatpush1.msra.mxu0 0.0
    %1778 = vmatprep.subr.mxu0 0.0
    %1779 = vmatpush1.msra.mxu0 0.0
    %1780 = vmatprep.subr.mxu0 0.0
    %1781 = vmatpush1.msra.mxu0 0.0
    %1782 = vmatprep.subr.mxu0 0.0
    %1783 = vmatpush1.msra.mxu0 0.0
    %1784 = vmatprep.subr.mxu0 0.0
    %1785 = vmatpush1.msra.mxu0 0.0
    %1786 = vmatprep.subr.mxu0 0.0
    %1787 = vmatpush1.msra.mxu0 0.0
    %1788 = vmatprep.subr.mxu0 0.0
    %1789 = vmatpush1.msra.mxu0 0.0
    %1790 = vmatprep.subr.mxu0 0.0
    %1791 = vmatpush1.msra.mxu0 0.0
    %1792 = vmatprep.subr.mxu0 0.0
    %1793 = vmatpush1.msra.mxu0 0.0
    %1794 = vmatprep.subr.mxu0 0.0
    %1795 = vmatpush1.msra.mxu0 0.0
    %1796 = vmatprep.subr.mxu0 0.0
    %1797 = vmatpush1.msra.mxu0 0.0
    %1798 = vmatprep.subr.mxu0 0.0
    %1799 = vmatpush1.msra.mxu0 0.0
    %1800 = vmatprep.subr.mxu0 0.0
    %1801 = vmatpush1.msra.mxu0 0.0
    %1802 = vmatprep.subr.mxu0 0.0
    %1803 = vmatpush1.msra.mxu0 0.0
    %1804 = vmatprep.subr.mxu0 0.0
    %1805 = vmatpush1.msra.mxu0 0.0
    %1806 = vmatprep.subr.mxu0 0.0
    %1807 = vmatpush1.msra.mxu0 0.0
    %1808 = vmatprep.subr.mxu0 0.0
    %1809 = vmatpush1.msra.mxu0 0.0
    %1810 = vmatprep.subr.mxu0 0.0
    %1811 = vmatpush1.msra.mxu0 0.0
    %1812 = vmatprep.subr.mxu0 0.0
    %1813 = vmatpush1.msra.mxu0 0.0
    %1814 = vmatprep.subr.mxu0 0.0
    %1815 = vmatpush1.msra.mxu0 0.0
    %1816 = vmatprep.subr.mxu0 0.0
    %1817 = vmatpush1.msra.mxu0 0.0
    %1818 = vmatprep.subr.mxu0 0.0
    %1819 = vmatpush1.msra.mxu0 0.0
    %1820 = vmatprep.subr.mxu0 0.0
    %1821 = vmatpush1.msra.mxu0 0.0
    %1822 = vmatprep.subr.mxu0 0.0
    %1823 = vmatpush1.msra.mxu0 0.0
    %1824 = vmatprep.subr.mxu0 0.0
    %1825 = vmatpush1.msra.mxu0 0.0
    %1826 = vmatprep.subr.mxu0 0.0
    %1827 = vmatpush1.msra.mxu0 0.0
    %1828 = vmatprep.subr.mxu0 0.0
    %1829 = vmatpush1.msra.mxu0 0.0
    %1830 = vmatprep.mubr.f32.mxu0 0.0
    %1831 = vmatmul.mubr.f32.gmra.mrb[0].mxu0 %v1764
    %v1832 = vpop.f32.mrb[0].mxu0
    %v1833 = vadd.f32 %v48, %v1832
    %v1834 = vpop.f32.mrb[0].mxu0
    %1835 = vdwg.mxu0
    %v1837 = vrot.slane %v1760, 4
    %1838 = vrot.lane.b32.xlu0 %v1837, 32
    %v1839 = vpop.permute.xlu0 %1838
    %v1840 = vsel %vm175, %v1839, 0
    %1842 = vmatprep.subr.mxu0 0.0
    %1843 = vmatpush1.msra.mxu0 %v31
    %1844 = vmatprep.subr.mxu0 0.0
    %1845 = vmatpush1.msra.mxu0 %v32
    %1846 = vmatprep.subr.mxu0 0.0
    %1847 = vmatpush1.msra.mxu0 %v33
    %1848 = vmatprep.subr.mxu0 0.0
    %1849 = vmatpush1.msra.mxu0 %v34
    %1850 = vmatprep.subr.mxu0 0.0
    %1851 = vmatpush1.msra.mxu0 0.0
    %1852 = vmatprep.subr.mxu0 0.0
    %1853 = vmatpush1.msra.mxu0 0.0
    %1854 = vmatprep.subr.mxu0 0.0
    %1855 = vmatpush1.msra.mxu0 0.0
    %1856 = vmatprep.subr.mxu0 0.0
    %1857 = vmatpush1.msra.mxu0 0.0
    %1858 = vmatprep.subr.mxu0 0.0
    %1859 = vmatpush1.msra.mxu0 0.0
    %1860 = vmatprep.subr.mxu0 0.0
    %1861 = vmatpush1.msra.mxu0 0.0
    %1862 = vmatprep.subr.mxu0 0.0
    %1863 = vmatpush1.msra.mxu0 0.0
    %1864 = vmatprep.subr.mxu0 0.0
    %1865 = vmatpush1.msra.mxu0 0.0
    %1866 = vmatprep.subr.mxu0 0.0
    %1867 = vmatpush1.msra.mxu0 0.0
    %1868 = vmatprep.subr.mxu0 0.0
    %1869 = vmatpush1.msra.mxu0 0.0
    %1870 = vmatprep.subr.mxu0 0.0
    %1871 = vmatpush1.msra.mxu0 0.0
    %1872 = vmatprep.subr.mxu0 0.0
    %1873 = vmatpush1.msra.mxu0 0.0
    %1874 = vmatprep.subr.mxu0 0.0
    %1875 = vmatpush1.msra.mxu0 0.0
    %1876 = vmatprep.subr.mxu0 0.0
    %1877 = vmatpush1.msra.mxu0 0.0
    %1878 = vmatprep.subr.mxu0 0.0
    %1879 = vmatpush1.msra.mxu0 0.0
    %1880 = vmatprep.subr.mxu0 0.0
    %1881 = vmatpush1.msra.mxu0 0.0
    %1882 = vmatprep.subr.mxu0 0.0
    %1883 = vmatpush1.msra.mxu0 0.0
    %1884 = vmatprep.subr.mxu0 0.0
    %1885 = vmatpush1.msra.mxu0 0.0
    %1886 = vmatprep.subr.mxu0 0.0
    %1887 = vmatpush1.msra.mxu0 0.0
    %1888 = vmatprep.subr.mxu0 0.0
    %1889 = vmatpush1.msra.mxu0 0.0
    %1890 = vmatprep.subr.mxu0 0.0
    %1891 = vmatpush1.msra.mxu0 0.0
    %1892 = vmatprep.subr.mxu0 0.0
    %1893 = vmatpush1.msra.mxu0 0.0
    %1894 = vmatprep.subr.mxu0 0.0
    %1895 = vmatpush1.msra.mxu0 0.0
    %1896 = vmatprep.subr.mxu0 0.0
    %1897 = vmatpush1.msra.mxu0 0.0
    %1898 = vmatprep.subr.mxu0 0.0
    %1899 = vmatpush1.msra.mxu0 0.0
    %1900 = vmatprep.subr.mxu0 0.0
    %1901 = vmatpush1.msra.mxu0 0.0
    %1902 = vmatprep.subr.mxu0 0.0
    %1903 = vmatpush1.msra.mxu0 0.0
    %1904 = vmatprep.subr.mxu0 0.0
    %1905 = vmatpush1.msra.mxu0 0.0
    %1906 = vmatprep.mubr.f32.mxu0 0.0
    %1907 = vmatmul.mubr.f32.gmra.mrb[0].mxu0 %v1840
    %v1908 = vpop.f32.mrb[0].mxu0
    %v1909 = vadd.f32 %v1833, %v1908
    %v1910 = vpop.f32.mrb[0].mxu0
    %1911 = vdwg.mxu0
    %v1912 = vtanh.pop %v1909
    %v1913 = vxor.u32 %v1909, 2147483648
    %v1914 = vmul.f32 %v1913, 1.442695
    %v1915 = vpow.pop %v1914
    %v1916 = vadd.f32 %v1915, 1.0
    %v1917 = vrcp.pop %v1916
    %v1918 = vmul.f32 1.0, %v1917
    %v1919 = vsel %vm146, %v1912, %v1918
    %v1920 = vmul.f32 %v1919, %v1652
    %1922 = vrot.lane.b32.xlu0 %v1919, 64
    %v1923 = vpop.permute.xlu0 %1922
    %v1925 = vmul.f32 %v1919, %v1923
    %1927 = vrot.lane.b32.xlu0 %v1925, 32
    %v1928 = vpop.permute.xlu0 %1927
    %v1930 = vadd.f32 %v1920, %v1928
    %v1931 = vtanh.pop %v1930
    %1933 = vrot.lane.b32.xlu0 %v1931, 64
    %v1934 = vpop.permute.xlu0 %1933
    %v1936 = vmul.f32 %v1919, %v1934
    %1937 = vmatprep.subr.mxu0 0.0
    %1938 = vmatpush1.msra.mxu0 %v27
    %1939 = vmatprep.subr.mxu0 0.0
    %1940 = vmatpush1.msra.mxu0 %v28
    %1941 = vmatprep.subr.mxu0 0.0
    %1942 = vmatpush1.msra.mxu0 %v29
    %1943 = vmatprep.subr.mxu0 0.0
    %1944 = vmatpush1.msra.mxu0 %v30
    %1945 = vmatprep.subr.mxu0 0.0
    %1946 = vmatpush1.msra.mxu0 0.0
    %1947 = vmatprep.subr.mxu0 0.0
    %1948 = vmatpush1.msra.mxu0 0.0
    %1949 = vmatprep.subr.mxu0 0.0
    %1950 = vmatpush1.msra.mxu0 0.0
    %1951 = vmatprep.subr.mxu0 0.0
    %1952 = vmatpush1.msra.mxu0 0.0
    %1953 = vmatprep.subr.mxu0 0.0
    %1954 = vmatpush1.msra.mxu0 0.0
    %1955 = vmatprep.subr.mxu0 0.0
    %1956 = vmatpush1.msra.mxu0 0.0
    %1957 = vmatprep.subr.mxu0 0.0
    %1958 = vmatpush1.msra.mxu0 0.0
    %1959 = vmatprep.subr.mxu0 0.0
    %1960 = vmatpush1.msra.mxu0 0.0
    %1961 = vmatprep.subr.mxu0 0.0
    %1962 = vmatpush1.msra.mxu0 0.0
    %1963 = vmatprep.subr.mxu0 0.0
    %1964 = vmatpush1.msra.mxu0 0.0
    %1965 = vmatprep.subr.mxu0 0.0
    %1966 = vmatpush1.msra.mxu0 0.0
    %1967 = vmatprep.subr.mxu0 0.0
    %1968 = vmatpush1.msra.mxu0 0.0
    %1969 = vmatprep.subr.mxu0 0.0
    %1970 = vmatpush1.msra.mxu0 0.0
    %1971 = vmatprep.subr.mxu0 0.0
    %1972 = vmatpush1.msra.mxu0 0.0
    %1973 = vmatprep.subr.mxu0 0.0
    %1974 = vmatpush1.msra.mxu0 0.0
    %1975 = vmatprep.subr.mxu0 0.0
    %1976 = vmatpush1.msra.mxu0 0.0
    %1977 = vmatprep.subr.mxu0 0.0
    %1978 = vmatpush1.msra.mxu0 0.0
    %1979 = vmatprep.subr.mxu0 0.0
    %1980 = vmatpush1.msra.mxu0 0.0
    %1981 = vmatprep.subr.mxu0 0.0
    %1982 = vmatpush1.msra.mxu0 0.0
    %1983 = vmatprep.subr.mxu0 0.0
    %1984 = vmatpush1.msra.mxu0 0.0
    %1985 = vmatprep.subr.mxu0 0.0
    %1986 = vmatpush1.msra.mxu0 0.0
    %1987 = vmatprep.subr.mxu0 0.0
    %1988 = vmatpush1.msra.mxu0 0.0
    %1989 = vmatprep.subr.mxu0 0.0
    %1990 = vmatpush1.msra.mxu0 0.0
    %1991 = vmatprep.subr.mxu0 0.0
    %1992 = vmatpush1.msra.mxu0 0.0
    %1993 = vmatprep.subr.mxu0 0.0
    %1994 = vmatpush1.msra.mxu0 0.0
    %1995 = vmatprep.subr.mxu0 0.0
    %1996 = vmatpush1.msra.mxu0 0.0
    %1997 = vmatprep.subr.mxu0 0.0
    %1998 = vmatpush1.msra.mxu0 0.0
    %1999 = vmatprep.subr.mxu0 0.0
    %2000 = vmatpush1.msra.mxu0 0.0
    %2001 = vmatprep.mubr.f32.mxu0 0.0
    %2002 = vmatmul.mubr.f32.gmra.mrb[0].mxu0 %v1840
    %v2003 = vpop.f32.mrb[0].mxu0
    %v2004 = vadd.f32 0.0, %v2003
    %v2005 = vpop.f32.mrb[0].mxu0
    %2006 = vdwg.mxu0
    %v2008 = vrot.slane %v2004, 2
    %v2010 = vadd.f32 %v139, %v2008
    %v2011 = vtanh.pop %v2010
    %v2012 = vxor.u32 %v2010, 2147483648
    %v2013 = vmul.f32 %v2012, 1.442695
    %v2014 = vpow.pop %v2013
    %v2015 = vadd.f32 %v2014, 1.0
    %v2016 = vrcp.pop %v2015
    %v2017 = vmul.f32 1.0, %v2016
    %v2018 = vsel %vm146, %v2011, %v2017
    %v2020 = vrot.slane %v1754, 6
    %v2022 = vmul.f32 %v2018, %v2020
    %2024 = vrot.lane.b32.xlu0 %v2018, 64
    %v2025 = vpop.permute.xlu0 %2024
    %v2027 = vmul.f32 %v2018, %v2025
    %2029 = vrot.lane.b32.xlu0 %v2027, 32
    %v2030 = vpop.permute.xlu0 %2029
    %v2032 = vadd.f32 %v2022, %v2030
    %v2033 = vtanh.pop %v2032
    %2035 = vrot.lane.b32.xlu0 %v2033, 64
    %v2036 = vpop.permute.xlu0 %2035
    %v2038 = vmul.f32 %v2018, %v2036
    %2040 = vrot.lane.b32.xlu0 %v1936, 32
    %v2041 = vpop.permute.xlu0 %2040
    %v2042 = vsel %vm175, %v2041, 0
    %2044 = vmatprep.subr.mxu0 0.0
    %2045 = vmatpush1.msra.mxu0 %v35
    %2046 = vmatprep.subr.mxu0 0.0
    %2047 = vmatpush1.msra.mxu0 %v36
    %2048 = vmatprep.subr.mxu0 0.0
    %2049 = vmatpush1.msra.mxu0 %v37
    %2050 = vmatprep.subr.mxu0 0.0
    %2051 = vmatpush1.msra.mxu0 %v38
    %2052 = vmatprep.subr.mxu0 0.0
    %2053 = vmatpush1.msra.mxu0 0.0
    %2054 = vmatprep.subr.mxu0 0.0
    %2055 = vmatpush1.msra.mxu0 0.0
    %2056 = vmatprep.subr.mxu0 0.0
    %2057 = vmatpush1.msra.mxu0 0.0
    %2058 = vmatprep.subr.mxu0 0.0
    %2059 = vmatpush1.msra.mxu0 0.0
    %2060 = vmatprep.subr.mxu0 0.0
    %2061 = vmatpush1.msra.mxu0 0.0
    %2062 = vmatprep.subr.mxu0 0.0
    %2063 = vmatpush1.msra.mxu0 0.0
    %2064 = vmatprep.subr.mxu0 0.0
    %2065 = vmatpush1.msra.mxu0 0.0
    %2066 = vmatprep.subr.mxu0 0.0
    %2067 = vmatpush1.msra.mxu0 0.0
    %2068 = vmatprep.subr.mxu0 0.0
    %2069 = vmatpush1.msra.mxu0 0.0
    %2070 = vmatprep.subr.mxu0 0.0
    %2071 = vmatpush1.msra.mxu0 0.0
    %2072 = vmatprep.subr.mxu0 0.0
    %2073 = vmatpush1.msra.mxu0 0.0
    %2074 = vmatprep.subr.mxu0 0.0
    %2075 = vmatpush1.msra.mxu0 0.0
    %2076 = vmatprep.subr.mxu0 0.0
    %2077 = vmatpush1.msra.mxu0 0.0
    %2078 = vmatprep.subr.mxu0 0.0
    %2079 = vmatpush1.msra.mxu0 0.0
    %2080 = vmatprep.subr.mxu0 0.0
    %2081 = vmatpush1.msra.mxu0 0.0
    %2082 = vmatprep.subr.mxu0 0.0
    %2083 = vmatpush1.msra.mxu0 0.0
    %2084 = vmatprep.subr.mxu0 0.0
    %2085 = vmatpush1.msra.mxu0 0.0
    %2086 = vmatprep.subr.mxu0 0.0
    %2087 = vmatpush1.msra.mxu0 0.0
    %2088 = vmatprep.subr.mxu0 0.0
    %2089 = vmatpush1.msra.mxu0 0.0
    %2090 = vmatprep.subr.mxu0 0.0
    %2091 = vmatpush1.msra.mxu0 0.0
    %2092 = vmatprep.subr.mxu0 0.0
    %2093 = vmatpush1.msra.mxu0 0.0
    %2094 = vmatprep.subr.mxu0 0.0
    %2095 = vmatpush1.msra.mxu0 0.0
    %2096 = vmatprep.subr.mxu0 0.0
    %2097 = vmatpush1.msra.mxu0 0.0
    %2098 = vmatprep.subr.mxu0 0.0
    %2099 = vmatpush1.msra.mxu0 0.0
    %2100 = vmatprep.subr.mxu0 0.0
    %2101 = vmatpush1.msra.mxu0 0.0
    %2102 = vmatprep.subr.mxu0 0.0
    %2103 = vmatpush1.msra.mxu0 0.0
    %2104 = vmatprep.subr.mxu0 0.0
    %2105 = vmatpush1.msra.mxu0 0.0
    %2106 = vmatprep.subr.mxu0 0.0
    %2107 = vmatpush1.msra.mxu0 0.0
    %2108 = vmatprep.mubr.f32.mxu0 0.0
    %2109 = vmatmul.mubr.f32.gmra.mrb[0].mxu0 %v2042
    %v2110 = vpop.f32.mrb[0].mxu0
    %v2111 = vadd.f32 %v48, %v2110
    %v2112 = vpop.f32.mrb[0].mxu0
    %2113 = vdwg.mxu0
    %v2115 = vrot.slane %v2038, 6
    %2116 = vrot.lane.b32.xlu0 %v2115, 32
    %v2117 = vpop.permute.xlu0 %2116
    %v2118 = vsel %vm175, %v2117, 0
    %2120 = vmatprep.subr.mxu0 0.0
    %2121 = vmatpush1.msra.mxu0 %v31
    %2122 = vmatprep.subr.mxu0 0.0
    %2123 = vmatpush1.msra.mxu0 %v32
    %2124 = vmatprep.subr.mxu0 0.0
    %2125 = vmatpush1.msra.mxu0 %v33
    %2126 = vmatprep.subr.mxu0 0.0
    %2127 = vmatpush1.msra.mxu0 %v34
    %2128 = vmatprep.subr.mxu0 0.0
    %2129 = vmatpush1.msra.mxu0 0.0
    %2130 = vmatprep.subr.mxu0 0.0
    %2131 = vmatpush1.msra.mxu0 0.0
    %2132 = vmatprep.subr.mxu0 0.0
    %2133 = vmatpush1.msra.mxu0 0.0
    %2134 = vmatprep.subr.mxu0 0.0
    %2135 = vmatpush1.msra.mxu0 0.0
    %2136 = vmatprep.subr.mxu0 0.0
    %2137 = vmatpush1.msra.mxu0 0.0
    %2138 = vmatprep.subr.mxu0 0.0
    %2139 = vmatpush1.msra.mxu0 0.0
    %2140 = vmatprep.subr.mxu0 0.0
    %2141 = vmatpush1.msra.mxu0 0.0
    %2142 = vmatprep.subr.mxu0 0.0
    %2143 = vmatpush1.msra.mxu0 0.0
    %2144 = vmatprep.subr.mxu0 0.0
    %2145 = vmatpush1.msra.mxu0 0.0
    %2146 = vmatprep.subr.mxu0 0.0
    %2147 = vmatpush1.msra.mxu0 0.0
    %2148 = vmatprep.subr.mxu0 0.0
    %2149 = vmatpush1.msra.mxu0 0.0
    %2150 = vmatprep.subr.mxu0 0.0
    %2151 = vmatpush1.msra.mxu0 0.0
    %2152 = vmatprep.subr.mxu0 0.0
    %2153 = vmatpush1.msra.mxu0 0.0
    %2154 = vmatprep.subr.mxu0 0.0
    %2155 = vmatpush1.msra.mxu0 0.0
    %2156 = vmatprep.subr.mxu0 0.0
    %2157 = vmatpush1.msra.mxu0 0.0
    %2158 = vmatprep.subr.mxu0 0.0
    %2159 = vmatpush1.msra.mxu0 0.0
    %2160 = vmatprep.subr.mxu0 0.0
    %2161 = vmatpush1.msra.mxu0 0.0
    %2162 = vmatprep.subr.mxu0 0.0
    %2163 = vmatpush1.msra.mxu0 0.0
    %2164 = vmatprep.subr.mxu0 0.0
    %2165 = vmatpush1.msra.mxu0 0.0
    %2166 = vmatprep.subr.mxu0 0.0
    %2167 = vmatpush1.msra.mxu0 0.0
    %2168 = vmatprep.subr.mxu0 0.0
    %2169 = vmatpush1.msra.mxu0 0.0
    %2170 = vmatprep.subr.mxu0 0.0
    %2171 = vmatpush1.msra.mxu0 0.0
    %2172 = vmatprep.subr.mxu0 0.0
    %2173 = vmatpush1.msra.mxu0 0.0
    %2174 = vmatprep.subr.mxu0 0.0
    %2175 = vmatpush1.msra.mxu0 0.0
    %2176 = vmatprep.subr.mxu0 0.0
    %2177 = vmatpush1.msra.mxu0 0.0
    %2178 = vmatprep.subr.mxu0 0.0
    %2179 = vmatpush1.msra.mxu0 0.0
    %2180 = vmatprep.subr.mxu0 0.0
    %2181 = vmatpush1.msra.mxu0 0.0
    %2182 = vmatprep.subr.mxu0 0.0
    %2183 = vmatpush1.msra.mxu0 0.0
    %2184 = vmatprep.mubr.f32.mxu0 0.0
    %2185 = vmatmul.mubr.f32.gmra.mrb[0].mxu0 %v2118
    %v2186 = vpop.f32.mrb[0].mxu0
    %v2187 = vadd.f32 %v2111, %v2186
    %v2188 = vpop.f32.mrb[0].mxu0
    %2189 = vdwg.mxu0
    %v2190 = vtanh.pop %v2187
    %v2191 = vxor.u32 %v2187, 2147483648
    %v2192 = vmul.f32 %v2191, 1.442695
    %v2193 = vpow.pop %v2192
    %v2194 = vadd.f32 %v2193, 1.0
    %v2195 = vrcp.pop %v2194
    %v2196 = vmul.f32 1.0, %v2195
    %v2197 = vsel %vm146, %v2190, %v2196
    %v2198 = vmul.f32 %v2197, %v1930
    %2200 = vrot.lane.b32.xlu0 %v2197, 64
    %v2201 = vpop.permute.xlu0 %2200
    %v2203 = vmul.f32 %v2197, %v2201
    %2205 = vrot.lane.b32.xlu0 %v2203, 32
    %v2206 = vpop.permute.xlu0 %2205
    %v2208 = vadd.f32 %v2198, %v2206
    %v2209 = vtanh.pop %v2208
    %2211 = vrot.lane.b32.xlu0 %v2209, 64
    %v2212 = vpop.permute.xlu0 %2211
    %v2214 = vmul.f32 %v2197, %v2212
    %2216 = vrot.lane.b32.xlu0 %v2214, 32
    %v2217 = vpop.permute.xlu0 %2216
    %v2218 = vsel %vm175, %v2217, 0
    %2220 = vmatprep.subr.mxu0 0.0
    %2221 = vmatpush1.msra.mxu0 %v39
    %2222 = vmatprep.subr.mxu0 0.0
    %2223 = vmatpush1.msra.mxu0 %v40
    %2224 = vmatprep.subr.mxu0 0.0
    %2225 = vmatpush1.msra.mxu0 %v41
    %2226 = vmatprep.subr.mxu0 0.0
    %2227 = vmatpush1.msra.mxu0 %v42
    %2228 = vmatprep.subr.mxu0 0.0
    %2229 = vmatpush1.msra.mxu0 0.0
    %2230 = vmatprep.subr.mxu0 0.0
    %2231 = vmatpush1.msra.mxu0 0.0
    %2232 = vmatprep.subr.mxu0 0.0
    %2233 = vmatpush1.msra.mxu0 0.0
    %2234 = vmatprep.subr.mxu0 0.0
    %2235 = vmatpush1.msra.mxu0 0.0
    %2236 = vmatprep.subr.mxu0 0.0
    %2237 = vmatpush1.msra.mxu0 0.0
    %2238 = vmatprep.subr.mxu0 0.0
    %2239 = vmatpush1.msra.mxu0 0.0
    %2240 = vmatprep.subr.mxu0 0.0
    %2241 = vmatpush1.msra.mxu0 0.0
    %2242 = vmatprep.subr.mxu0 0.0
    %2243 = vmatpush1.msra.mxu0 0.0
    %2244 = vmatprep.subr.mxu0 0.0
    %2245 = vmatpush1.msra.mxu0 0.0
    %2246 = vmatprep.subr.mxu0 0.0
    %2247 = vmatpush1.msra.mxu0 0.0
    %2248 = vmatprep.subr.mxu0 0.0
    %2249 = vmatpush1.msra.mxu0 0.0
    %2250 = vmatprep.subr.mxu0 0.0
    %2251 = vmatpush1.msra.mxu0 0.0
    %2252 = vmatprep.subr.mxu0 0.0
    %2253 = vmatpush1.msra.mxu0 0.0
    %2254 = vmatprep.subr.mxu0 0.0
    %2255 = vmatpush1.msra.mxu0 0.0
    %2256 = vmatprep.subr.mxu0 0.0
    %2257 = vmatpush1.msra.mxu0 0.0
    %2258 = vmatprep.subr.mxu0 0.0
    %2259 = vmatpush1.msra.mxu0 0.0
    %2260 = vmatprep.subr.mxu0 0.0
    %2261 = vmatpush1.msra.mxu0 0.0
    %2262 = vmatprep.subr.mxu0 0.0
    %2263 = vmatpush1.msra.mxu0 0.0
    %2264 = vmatprep.subr.mxu0 0.0
    %2265 = vmatpush1.msra.mxu0 0.0
    %2266 = vmatprep.subr.mxu0 0.0
    %2267 = vmatpush1.msra.mxu0 0.0
    %2268 = vmatprep.subr.mxu0 0.0
    %2269 = vmatpush1.msra.mxu0 0.0
    %2270 = vmatprep.subr.mxu0 0.0
    %2271 = vmatpush1.msra.mxu0 0.0
    %2272 = vmatprep.subr.mxu0 0.0
    %2273 = vmatpush1.msra.mxu0 0.0
    %2274 = vmatprep.subr.mxu0 0.0
    %2275 = vmatpush1.msra.mxu0 0.0
    %2276 = vmatprep.subr.mxu0 0.0
    %2277 = vmatpush1.msra.mxu0 0.0
    %2278 = vmatprep.subr.mxu0 0.0
    %2279 = vmatpush1.msra.mxu0 0.0
    %2280 = vmatprep.subr.mxu0 0.0
    %2281 = vmatpush1.msra.mxu0 0.0
    %2282 = vmatprep.subr.mxu0 0.0
    %2283 = vmatpush1.msra.mxu0 0.0
    %2284 = vmatprep.mubr.f32.mxu0 0.0
    %2285 = vmatmul.mubr.f32.gmra.mrb[0].mxu0 %v2218
    %v2286 = vpop.f32.mrb[0].mxu0
    %v2287 = vadd.f32 %v53, %v2286
    %v2288 = vpop.f32.mrb[0].mxu0
    %2289 = vdwg.mxu0
    %2290 = vst [vmem:[#allocation5] sm:$0x3] %v2287
    // Predicated region
    $region14: #{tpu_custom_call.1} parent=1 // pred_check
      _
    $region15: #{tpu_custom_call.1} parent=1 // pred_check_branch
      %2292 = sbr.rel (0) target = $region17
    $region16: #{tpu_custom_call.1} parent=1 // pred_region
      %s2294 = ssub.s32 32, 32
      %2295 = vsyncadd [#allocation4], %s2294
      %s2297 = sshll.u32 [#allocation5], 4
      %s2298 = int_to_ptr.vmem [resolvable:$true] %s2297
      %2300 = dma.vmem_to_hbm [thread:$0]  %s2298, 32, %s2, [#allocation4]
    $region17: #{tpu_custom_call.1} parent=1 // pred_fallthru
      _
    // Predicated region
    $region18: #{tpu_custom_call.1} parent=1 // pred_check
      _
    $region19: #{tpu_custom_call.1} parent=1 // pred_check_branch
      %2302 = sbr.rel (0) target = $region21
    $region20: #{tpu_custom_call.1} parent=1 // pred_region
      %2303 = dma.done [#allocation4], 32
    $region21: #{tpu_custom_call.1} parent=1 // pred_fallthru
      _
    %2304 = vsyncpa [#allocation3], 1
    %2305 = vsyncpa [#allocation4], 1

</llo_original>
